<compile_context>
chip_gen: v7x
topology: tpu7x:2x2x1
jax: 0.10.0
libtpu: 0.0.40
codegen_flags: <defaults>
</compile_context>

<pallas_src>
import functools

import jax
import jax.numpy as jnp
from jax import lax
from jax.experimental import pallas as pl
from jax.experimental.pallas import tpu as pltpu

BN_EPS = 1e-5

# MXU operand dtype. Keep float32 to match the float32 PyTorch module; on
# v6e/v7x set to jnp.bfloat16 for the bf16-native MXU (accumulation stays
# float32 via preferred_element_type) when the surrounding model is bf16.
MXU_DTYPE = jnp.float32


# ----------------------------------------------------------------------------
# Shared in-kernel helpers
# ----------------------------------------------------------------------------
def _conv3x3_bias(x, w_ref, b_ref, xp_ref, p_ref, H, W):
    """3x3 SAME conv + bias for one image as a single im2col matmul.

    x      : (Cin, H*W) f32 activation (spatial flattened onto lanes).
    w_ref  : (Cout, 9*Cin) weights, K ordered as (kh, kw, cin).
    b_ref  : (Cout, 1) bias.
    xp_ref : (Cin, H*W + 2*(W+1)) VMEM scratch (zero-padded flat spatial).
    p_ref  : (9*Cin, H*W) VMEM scratch (im2col patches).
    returns: (Cout, H*W) f32.
    """
    cin, hw = x.shape
    pad = W + 1                       # covers flat offsets in [-(W+1), W+1]

    # SAME zero padding done in VMEM -- no jnp.pad / extra HBM pass.
    xp_ref[:, :pad] = jnp.zeros((cin, pad), jnp.float32)
    xp_ref[:, pad + hw:] = jnp.zeros((cin, pad), jnp.float32)
    xp_ref[:, pad:pad + hw] = x

    # Column-boundary masks; row boundaries fall into the zero margins above.
    col = lax.broadcasted_iota(jnp.int32, (1, hw), 1) % W
    not_left = (col >= 1).astype(jnp.float32)
    not_right = (col <= W - 2).astype(jnp.float32)

    for kh in range(3):
        for kw in range(3):
            off = (kh - 1) * W + (kw - 1)
            tap = xp_ref[:, pad + off:pad + off + hw]      # (Cin, H*W)
            if kw == 0:
                tap = tap * not_left
            elif kw == 2:
                tap = tap * not_right
            r = (kh * 3 + kw) * cin
            p_ref[r:r + cin, :] = tap

    acc = jnp.dot(w_ref[...].astype(MXU_DTYPE),
                  p_ref[...].astype(MXU_DTYPE),
                  preferred_element_type=jnp.float32)       # (Cout, H*W)
    return acc + b_ref[...].astype(jnp.float32)


def _emit_conv_outputs(acc, y_ref, stats_ref):
    y_ref[0] = acc.astype(y_ref.dtype)
    # Per-image, per-channel partial sums for the full-batch BN statistics.
    stats_ref[0, :, 0:1] = jnp.sum(acc, axis=1, keepdims=True)
    stats_ref[0, :, 1:2] = jnp.sum(acc * acc, axis=1, keepdims=True)


# ----------------------------------------------------------------------------
# Kernels
# ----------------------------------------------------------------------------
def _conv_stats_kernel(x_ref, w_ref, b_ref, y_ref, stats_ref,
                       xp_ref, p_ref, *, H, W):
    acc = _conv3x3_bias(x_ref[0].astype(jnp.float32), w_ref, b_ref,
                        xp_ref, p_ref, H, W)
    _emit_conv_outputs(acc, y_ref, stats_ref)


def _bnrelu_conv_stats_kernel(y1_ref, sc_ref, sh_ref, w_ref, b_ref,
                              y2_ref, stats_ref, xp_ref, p_ref, *, H, W):
    # BN1 (folded scale/shift) + ReLU fused into conv2's prologue.
    a = jnp.maximum(
        y1_ref[0].astype(jnp.float32) * sc_ref[...] + sh_ref[...], 0.0)
    acc = _conv3x3_bias(a, w_ref, b_ref, xp_ref, p_ref, H, W)
    _emit_conv_outputs(acc, y2_ref, stats_ref)


def _bnrelu_kernel(y_ref, sc_ref, sh_ref, o_ref):
    o_ref[0] = jnp.maximum(
        y_ref[0].astype(jnp.float32) * sc_ref[...] + sh_ref[...],
        0.0).astype(o_ref.dtype)


# ----------------------------------------------------------------------------
# Wrapper
# ----------------------------------------------------------------------------
def _fold_bn(stats, gamma, beta, count):
    """stats: (N, C, 2) per-image (sum, sumsq) -> folded (scale, shift), (C,1)."""
    s = jnp.sum(stats, axis=0)                     # (C, 2)
    mean = s[:, 0] / count
    var = s[:, 1] / count - mean * mean            # biased variance (train mode)
    scale = gamma * lax.rsqrt(var + BN_EPS)
    shift = beta - mean * scale
    return (scale.reshape(-1, 1).astype(jnp.float32),
            shift.reshape(-1, 1).astype(jnp.float32))


def double_conv(x_nchw, params):
    """(Conv3x3 -> BN(train stats) -> ReLU) x 2.  NCHW in / NCHW out."""
    (w1, b1, g1, be1, w2, b2, g2, be2) = params    # conv weights in OIHW
    N, Cin, H, W = x_nchw.shape
    C1, C2 = w1.shape[0], w2.shape[0]
    HW = H * W
    assert HW % 128 == 0, "H*W must be a multiple of 128 for lane-dense blocks"
    HWP = HW + 2 * (W + 1)
    count = float(N * HW)

    xf = x_nchw.reshape(N, Cin, HW)                          # free (contiguous)
    w1m = jnp.transpose(w1, (0, 2, 3, 1)).reshape(C1, 9 * Cin)
    w2m = jnp.transpose(w2, (0, 2, 3, 1)).reshape(C2, 9 * C1)

    cp = pltpu.CompilerParams(
        dimension_semantics=("parallel",),          # batch images independent
        vmem_limit_bytes=32 * 1024 * 1024)

    # ---- kernel A: conv1 + bias, per-image BN partial stats ----------------
    y1, st1 = pl.pallas_call(
        functools.partial(_conv_stats_kernel, H=H, W=W),
        out_shape=(jax.ShapeDtypeStruct((N, C1, HW), jnp.float32),
                   jax.ShapeDtypeStruct((N, C1, 2), jnp.float32)),
        grid=(N,),
        in_specs=[pl.BlockSpec((1, Cin, HW), lambda n: (n, 0, 0)),
                  pl.BlockSpec((C1, 9 * Cin), lambda n: (0, 0)),
                  pl.BlockSpec((C1, 1), lambda n: (0, 0))],
        out_specs=(pl.BlockSpec((1, C1, HW), lambda n: (n, 0, 0)),
                   pl.BlockSpec((1, C1, 2), lambda n: (n, 0, 0))),
        scratch_shapes=[pltpu.VMEM((Cin, HWP), jnp.float32),
                        pltpu.VMEM((9 * Cin, HW), jnp.float32)],
        compiler_params=cp,
    )(xf, w1m, b1.reshape(C1, 1))

    sc1, sh1 = _fold_bn(st1, g1, be1, count)       # tiny (C,) host-side math

    # ---- kernel B: BN1+ReLU + conv2 + bias, per-image BN partial stats -----
    y2, st2 = pl.pallas_call(
        functools.partial(_bnrelu_conv_stats_kernel, H=H, W=W),
        out_shape=(jax.ShapeDtypeStruct((N, C2, HW), jnp.float32),
                   jax.ShapeDtypeStruct((N, C2, 2), jnp.float32)),
        grid=(N,),
        in_specs=[pl.BlockSpec((1, C1, HW), lambda n: (n, 0, 0)),
                  pl.BlockSpec((C1, 1), lambda n: (0, 0)),
                  pl.BlockSpec((C1, 1), lambda n: (0, 0)),
                  pl.BlockSpec((C2, 9 * C1), lambda n: (0, 0)),
                  pl.BlockSpec((C2, 1), lambda n: (0, 0))],
        out_specs=(pl.BlockSpec((1, C2, HW), lambda n: (n, 0, 0)),
                   pl.BlockSpec((1, C2, 2), lambda n: (n, 0, 0))),
        scratch_shapes=[pltpu.VMEM((C1, HWP), jnp.float32),
                        pltpu.VMEM((9 * C1, HW), jnp.float32)],
        compiler_params=cp,
    )(y1, sc1, sh1, w2m, b2.reshape(C2, 1))

    sc2, sh2 = _fold_bn(st2, g2, be2, count)

    # ---- kernel C: BN2 + ReLU ----------------------------------------------
    out = pl.pallas_call(
        _bnrelu_kernel,
        out_shape=jax.ShapeDtypeStruct((N, C2, HW), jnp.float32),
        grid=(N,),
        in_specs=[pl.BlockSpec((1, C2, HW), lambda n: (n, 0, 0)),
                  pl.BlockSpec((C2, 1), lambda n: (0, 0)),
                  pl.BlockSpec((C2, 1), lambda n: (0, 0))],
        out_specs=pl.BlockSpec((1, C2, HW), lambda n: (n, 0, 0)),
        compiler_params=cp,
    )(y2, sc2, sh2)

    return out.reshape(N, C2, H, W)                # free (contiguous)


# ----------------------------------------------------------------------------
# Pure-JAX reference (same math) for validation.
# ----------------------------------------------------------------------------
def double_conv_ref(x, params):
    (w1, b1, g1, be1, w2, b2, g2, be2) = params

    def conv(x, w, b):
        y = lax.conv_general_dilated(
            x, w, window_strides=(1, 1), padding="SAME",
            dimension_numbers=("NCHW", "OIHW", "NCHW"))
        return y + b.reshape(1, -1, 1, 1)

    def bn_relu(y, g, be):
        mean = jnp.mean(y, axis=(0, 2, 3), keepdims=True)
        var = jnp.mean((y - mean) ** 2, axis=(0, 2, 3), keepdims=True)
        out = (y - mean) * lax.rsqrt(var + BN_EPS) * g.reshape(1, -1, 1, 1) \
            + be.reshape(1, -1, 1, 1)
        return jnp.maximum(out, 0.0)

    y = bn_relu(conv(x, w1, b1), g1, be1)
    y = bn_relu(conv(y, w2, b2), g2, be2)
    return y


def init_params(key, in_channels, out_channels):
    ks = jax.random.split(key, 6)
    # Conv weights in PyTorch OIHW layout (Cout, Cin, 3, 3); deterministic init.
    w1 = 0.1 * jax.random.normal(ks[0], (out_channels, in_channels, 3, 3), jnp.float32)
    b1 = 0.1 * jax.random.normal(ks[1], (out_channels,), jnp.float32)
    g1 = 1.0 + 0.1 * jax.random.normal(ks[2], (out_channels,), jnp.float32)
    be1 = 0.1 * jax.random.normal(ks[3], (out_channels,), jnp.float32)
    w2 = 0.1 * jax.random.normal(ks[4], (out_channels, out_channels, 3, 3), jnp.float32)
    b2 = 0.1 * jax.random.normal(ks[5], (out_channels,), jnp.float32)
    g2 = jnp.ones((out_channels,), jnp.float32)
    be2 = jnp.zeros((out_channels,), jnp.float32)
    return (w1, b1, g1, be1, w2, b2, g2, be2)


if __name__ == "__main__":
    key = jax.random.PRNGKey(0)
    k_x, k_p = jax.random.split(key)

    N, Cin, H, W = 2, 4, 16, 16
    Cout = 8
    x = jax.random.normal(k_x, (N, Cin, H, W), jnp.float32)   # NCHW, like PyTorch
    params = init_params(k_p, Cin, Cout)

    out = jax.block_until_ready(jax.jit(double_conv)(x, params))
    ref = jax.block_until_ready(double_conv_ref(x, params))

    assert out.shape == (N, Cout, H, W), out.shape
    err = float(jnp.max(jnp.abs(out - ref)))
    assert jnp.allclose(out, ref, atol=2e-4, rtol=2e-4), err
    print("KERNEL_OK")
</pallas_src>

<mosaic_0001>
module attributes {stable_mosaic.version = 11 : i64} {
  func.func @_conv_stats_kernel(%arg0: i32, %arg1: memref<1x4x256xf32, #tpu.memory_space<vmem>>, %arg2: memref<8x36xf32, #tpu.memory_space<vmem>>, %arg3: memref<8x1xf32, #tpu.memory_space<vmem>>, %arg4: memref<1x8x256xf32, #tpu.memory_space<vmem>>, %arg5: memref<1x8x2xf32, #tpu.memory_space<vmem>>, %arg6: memref<4x290xf32, #tpu.memory_space<vmem>>, %arg7: memref<36x256xf32, #tpu.memory_space<vmem>>) attributes {dimension_semantics = [#tpu.dimension_semantics<parallel>], iteration_bounds = array<i64: 2>, scalar_prefetch = 0 : i64, scratch_operands = 2 : i64, tpu.core_type = #tpu.core_type<tc>, window_params = [{transform_indices = @transform_0, window_bounds = array<i64: 1, 4, 256>}, {pipeline_mode = #tpu.pipeline_mode<synchronous>, transform_indices = @transform_1, window_bounds = array<i64: 8, 36>}, {pipeline_mode = #tpu.pipeline_mode<synchronous>, transform_indices = @transform_2, window_bounds = array<i64: 8, 1>}, {transform_indices = @transform_3, window_bounds = array<i64: 1, 8, 256>}, {transform_indices = @transform_4, window_bounds = array<i64: 1, 8, 2>}]} {
    %c0 = arith.constant 0 : index
    %c0_0 = arith.constant 0 : index
    %c0_1 = arith.constant 0 : index
    %0 = vector.load %arg1[%c0, %c0_0, %c0_1] : memref<1x4x256xf32, #tpu.memory_space<vmem>>, vector<1x4x256xf32>
    %1 = vector.shape_cast %0 : vector<1x4x256xf32> to vector<4x256xf32>
    %cst = arith.constant 0.000000e+00 : f32
    %2 = vector.broadcast %cst : f32 to vector<4x17xf32>
    %c0_2 = arith.constant 0 : index
    %c0_3 = arith.constant 0 : index
    %3 = vector.load %arg6[%c0_2, %c0_3] : memref<4x290xf32, #tpu.memory_space<vmem>>, vector<4x17xf32>
    tpu.vector_store %arg6[%c0_2, %c0_3], %2 {strides = array<i32>} : memref<4x290xf32, #tpu.memory_space<vmem>>, vector<4x17xf32>,
    %cst_4 = arith.constant 0.000000e+00 : f32
    %4 = vector.broadcast %cst_4 : f32 to vector<4x17xf32>
    %c0_5 = arith.constant 0 : index
    %c273 = arith.constant 273 : index
    %5 = vector.load %arg6[%c0_5, %c273] : memref<4x290xf32, #tpu.memory_space<vmem>>, vector<4x17xf32>
    tpu.vector_store %arg6[%c0_5, %c273], %4 {strides = array<i32>} : memref<4x290xf32, #tpu.memory_space<vmem>>, vector<4x17xf32>,
    %c0_6 = arith.constant 0 : index
    %c17 = arith.constant 17 : index
    %6 = vector.load %arg6[%c0_6, %c17] : memref<4x290xf32, #tpu.memory_space<vmem>>, vector<4x256xf32>
    tpu.vector_store %arg6[%c0_6, %c17], %1 {strides = array<i32>} : memref<4x290xf32, #tpu.memory_space<vmem>>, vector<4x256xf32>,
    %7 = tpu.iota {dimensions = array<i32: 1>} : vector<1x256xi32>
    %c16_i32 = arith.constant 16 : i32
    %c0_i32 = arith.constant 0 : i32
    %8 = arith.cmpi eq, %c16_i32, %c0_i32 : i32
    %c1_i32 = arith.constant 1 : i32
    %9 = arith.select %8, %c1_i32, %c16_i32 : i32
    %10 = vector.broadcast %9 : i32 to vector<1x256xi32>
    %11 = arith.remsi %7, %10 : vector<1x256xi32>
    %c0_i32_7 = arith.constant 0 : i32
    %12 = vector.broadcast %c0_i32_7 : i32 to vector<1x256xi32>
    %13 = arith.cmpi ne, %11, %12 : vector<1x256xi32>
    %c0_i32_8 = arith.constant 0 : i32
    %14 = vector.broadcast %c0_i32_8 : i32 to vector<1x256xi32>
    %15 = arith.cmpi slt, %11, %14 : vector<1x256xi32>
    %c0_i32_9 = arith.constant 0 : i32
    %16 = arith.cmpi slt, %9, %c0_i32_9 : i32
    %17 = vector.broadcast %16 : i1 to vector<1x256xi1>
    %18 = vector.broadcast %17 : vector<1x256xi1> to vector<1x256xi1>
    %19 = arith.xori %15, %18 : vector<1x256xi1>
    %20 = arith.andi %19, %13 : vector<1x256xi1>
    %21 = vector.broadcast %9 : i32 to vector<1x256xi32>
    %22 = arith.addi %11, %21 : vector<1x256xi32>
    %23 = arith.select %20, %22, %11 : vector<1x256xi1>, vector<1x256xi32>
    %c1_i32_10 = arith.constant 1 : i32
    %24 = vector.broadcast %c1_i32_10 : i32 to vector<1x256xi32>
    %25 = arith.cmpi sge, %23, %24 : vector<1x256xi32>
    %26 = arith.extui %25 : vector<1x256xi1> to vector<1x256xi32>
    %27 = arith.sitofp %26 : vector<1x256xi32> to vector<1x256xf32>
    %c14_i32 = arith.constant 14 : i32
    %28 = vector.broadcast %c14_i32 : i32 to vector<1x256xi32>
    %29 = arith.cmpi sle, %23, %28 : vector<1x256xi32>
    %30 = arith.extui %29 : vector<1x256xi1> to vector<1x256xi32>
    %31 = arith.sitofp %30 : vector<1x256xi32> to vector<1x256xf32>
    %c0_11 = arith.constant 0 : index
    %c0_12 = arith.constant 0 : index
    %32 = vector.load %arg6[%c0_11, %c0_12] : memref<4x290xf32, #tpu.memory_space<vmem>>, vector<4x256xf32>
    %33 = vector.broadcast %27 : vector<1x256xf32> to vector<4x256xf32>
    %34 = arith.mulf %32, %33 : vector<4x256xf32>
    %c0_13 = arith.constant 0 : index
    %c0_14 = arith.constant 0 : index
    %35 = vector.load %arg7[%c0_13, %c0_14] : memref<36x256xf32, #tpu.memory_space<vmem>>, vector<4x256xf32>
    tpu.vector_store %arg7[%c0_13, %c0_14], %34 {strides = array<i32>} : memref<36x256xf32, #tpu.memory_space<vmem>>, vector<4x256xf32>,
    %c0_15 = arith.constant 0 : index
    %c1 = arith.constant 1 : index
    %36 = vector.load %arg6[%c0_15, %c1] : memref<4x290xf32, #tpu.memory_space<vmem>>, vector<4x256xf32>
    %c4 = arith.constant 4 : index
    %c0_16 = arith.constant 0 : index
    %37 = vector.load %arg7[%c4, %c0_16] : memref<36x256xf32, #tpu.memory_space<vmem>>, vector<4x256xf32>
    tpu.vector_store %arg7[%c4, %c0_16], %36 {strides = array<i32>} : memref<36x256xf32, #tpu.memory_space<vmem>>, vector<4x256xf32>,
    %c0_17 = arith.constant 0 : index
    %c2 = arith.constant 2 : index
    %38 = vector.load %arg6[%c0_17, %c2] : memref<4x290xf32, #tpu.memory_space<vmem>>, vector<4x256xf32>
    %39 = vector.broadcast %31 : vector<1x256xf32> to vector<4x256xf32>
    %40 = arith.mulf %38, %39 : vector<4x256xf32>
    %c8 = arith.constant 8 : index
    %c0_18 = arith.constant 0 : index
    %41 = vector.load %arg7[%c8, %c0_18] : memref<36x256xf32, #tpu.memory_space<vmem>>, vector<4x256xf32>
    tpu.vector_store %arg7[%c8, %c0_18], %40 {strides = array<i32>} : memref<36x256xf32, #tpu.memory_space<vmem>>, vector<4x256xf32>,
    %c0_19 = arith.constant 0 : index
    %c16 = arith.constant 16 : index
    %42 = vector.load %arg6[%c0_19, %c16] : memref<4x290xf32, #tpu.memory_space<vmem>>, vector<4x256xf32>
    %43 = vector.broadcast %27 : vector<1x256xf32> to vector<4x256xf32>
    %44 = arith.mulf %42, %43 : vector<4x256xf32>
    %c12 = arith.constant 12 : index
    %c0_20 = arith.constant 0 : index
    %45 = vector.load %arg7[%c12, %c0_20] : memref<36x256xf32, #tpu.memory_space<vmem>>, vector<4x256xf32>
    tpu.vector_store %arg7[%c12, %c0_20], %44 {strides = array<i32>} : memref<36x256xf32, #tpu.memory_space<vmem>>, vector<4x256xf32>,
    %c0_21 = arith.constant 0 : index
    %c17_22 = arith.constant 17 : index
    %46 = vector.load %arg6[%c0_21, %c17_22] : memref<4x290xf32, #tpu.memory_space<vmem>>, vector<4x256xf32>
    %c16_23 = arith.constant 16 : index
    %c0_24 = arith.constant 0 : index
    %47 = vector.load %arg7[%c16_23, %c0_24] : memref<36x256xf32, #tpu.memory_space<vmem>>, vector<4x256xf32>
    tpu.vector_store %arg7[%c16_23, %c0_24], %46 {strides = array<i32>} : memref<36x256xf32, #tpu.memory_space<vmem>>, vector<4x256xf32>,
    %c0_25 = arith.constant 0 : index
    %c18 = arith.constant 18 : index
    %48 = vector.load %arg6[%c0_25, %c18] : memref<4x290xf32, #tpu.memory_space<vmem>>, vector<4x256xf32>
    %49 = vector.broadcast %31 : vector<1x256xf32> to vector<4x256xf32>
    %50 = arith.mulf %48, %49 : vector<4x256xf32>
    %c20 = arith.constant 20 : index
    %c0_26 = arith.constant 0 : index
    %51 = vector.load %arg7[%c20, %c0_26] : memref<36x256xf32, #tpu.memory_space<vmem>>, vector<4x256xf32>
    tpu.vector_store %arg7[%c20, %c0_26], %50 {strides = array<i32>} : memref<36x256xf32, #tpu.memory_space<vmem>>, vector<4x256xf32>,
    %c0_27 = arith.constant 0 : index
    %c32 = arith.constant 32 : index
    %52 = vector.load %arg6[%c0_27, %c32] : memref<4x290xf32, #tpu.memory_space<vmem>>, vector<4x256xf32>
    %53 = vector.broadcast %27 : vector<1x256xf32> to vector<4x256xf32>
    %54 = arith.mulf %52, %53 : vector<4x256xf32>
    %c24 = arith.constant 24 : index
    %c0_28 = arith.constant 0 : index
    %55 = vector.load %arg7[%c24, %c0_28] : memref<36x256xf32, #tpu.memory_space<vmem>>, vector<4x256xf32>
    tpu.vector_store %arg7[%c24, %c0_28], %54 {strides = array<i32>} : memref<36x256xf32, #tpu.memory_space<vmem>>, vector<4x256xf32>,
    %c0_29 = arith.constant 0 : index
    %c33 = arith.constant 33 : index
    %56 = vector.load %arg6[%c0_29, %c33] : memref<4x290xf32, #tpu.memory_space<vmem>>, vector<4x256xf32>
    %c28 = arith.constant 28 : index
    %c0_30 = arith.constant 0 : index
    %57 = vector.load %arg7[%c28, %c0_30] : memref<36x256xf32, #tpu.memory_space<vmem>>, vector<4x256xf32>
    tpu.vector_store %arg7[%c28, %c0_30], %56 {strides = array<i32>} : memref<36x256xf32, #tpu.memory_space<vmem>>, vector<4x256xf32>,
    %c0_31 = arith.constant 0 : index
    %c34 = arith.constant 34 : index
    %58 = vector.load %arg6[%c0_31, %c34] : memref<4x290xf32, #tpu.memory_space<vmem>>, vector<4x256xf32>
    %59 = vector.broadcast %31 : vector<1x256xf32> to vector<4x256xf32>
    %60 = arith.mulf %58, %59 : vector<4x256xf32>
    %c32_32 = arith.constant 32 : index
    %c0_33 = arith.constant 0 : index
    %61 = vector.load %arg7[%c32_32, %c0_33] : memref<36x256xf32, #tpu.memory_space<vmem>>, vector<4x256xf32>
    tpu.vector_store %arg7[%c32_32, %c0_33], %60 {strides = array<i32>} : memref<36x256xf32, #tpu.memory_space<vmem>>, vector<4x256xf32>,
    %c0_34 = arith.constant 0 : index
    %c0_35 = arith.constant 0 : index
    %62 = vector.load %arg2[%c0_34, %c0_35] : memref<8x36xf32, #tpu.memory_space<vmem>>, vector<8x36xf32>
    %c0_36 = arith.constant 0 : index
    %c0_37 = arith.constant 0 : index
    %63 = vector.load %arg7[%c0_36, %c0_37] : memref<36x256xf32, #tpu.memory_space<vmem>>, vector<36x256xf32>
    %cst_38 = arith.constant dense<0.000000e+00> : vector<8x256xf32>
    %64 = tpu.matmul %62, %63, %cst_38 {dimension_numbers = #tpu.dot_dimension_numbers<[1], [0], [0], [1], [0, 0, 1, 1], [], []>} : vector<8x36xf32>, vector<36x256xf32>, vector<8x256xf32> -> vector<8x256xf32>
    %c0_39 = arith.constant 0 : index
    %c0_40 = arith.constant 0 : index
    %65 = vector.load %arg3[%c0_39, %c0_40] : memref<8x1xf32, #tpu.memory_space<vmem>>, vector<8x1xf32>
    %66 = vector.broadcast %65 : vector<8x1xf32> to vector<8x256xf32>
    %67 = arith.addf %64, %66 : vector<8x256xf32>
    %c0_41 = arith.constant 0 : index
    %c0_42 = arith.constant 0 : index
    %c0_43 = arith.constant 0 : index
    %68 = vector.load %arg4[%c0_41, %c0_42, %c0_43] : memref<1x8x256xf32, #tpu.memory_space<vmem>>, vector<1x8x256xf32>
    %69 = vector.shape_cast %68 : vector<1x8x256xf32> to vector<8x256xf32>
    %70 = vector.shape_cast %67 : vector<8x256xf32> to vector<1x8x256xf32>
    tpu.vector_store %arg4[%c0_41, %c0_42, %c0_43], %70 {strides = array<i32>} : memref<1x8x256xf32, #tpu.memory_space<vmem>>, vector<1x8x256xf32>,
    %cst_44 = arith.constant dense<0.000000e+00> : vector<8xf32>
    %71 = vector.multi_reduction <add>, %67, %cst_44 [1] : vector<8x256xf32> to vector<8xf32>
    %72 = vector.shape_cast %71 : vector<8xf32> to vector<8x1xf32>
    %c0_45 = arith.constant 0 : index
    %c0_46 = arith.constant 0 : index
    %c0_47 = arith.constant 0 : index
    %73 = vector.load %arg5[%c0_45, %c0_46, %c0_47] : memref<1x8x2xf32, #tpu.memory_space<vmem>>, vector<1x8x1xf32>
    %74 = vector.shape_cast %73 : vector<1x8x1xf32> to vector<8x1xf32>
    %75 = vector.shape_cast %72 : vector<8x1xf32> to vector<1x8x1xf32>
    tpu.vector_store %arg5[%c0_45, %c0_46, %c0_47], %75 {strides = array<i32>} : memref<1x8x2xf32, #tpu.memory_space<vmem>>, vector<1x8x1xf32>,
    %76 = arith.mulf %67, %67 : vector<8x256xf32>
    %cst_48 = arith.constant dense<0.000000e+00> : vector<8xf32>
    %77 = vector.multi_reduction <add>, %76, %cst_48 [1] : vector<8x256xf32> to vector<8xf32>
    %78 = vector.shape_cast %77 : vector<8xf32> to vector<8x1xf32>
    %c0_49 = arith.constant 0 : index
    %c0_50 = arith.constant 0 : index
    %c1_51 = arith.constant 1 : index
    %79 = vector.load %arg5[%c0_49, %c0_50, %c1_51] : memref<1x8x2xf32, #tpu.memory_space<vmem>>, vector<1x8x1xf32>
    %80 = vector.shape_cast %79 : vector<1x8x1xf32> to vector<8x1xf32>
    %81 = vector.shape_cast %78 : vector<8x1xf32> to vector<1x8x1xf32>
    tpu.vector_store %arg5[%c0_49, %c0_50, %c1_51], %81 {strides = array<i32>} : memref<1x8x2xf32, #tpu.memory_space<vmem>>, vector<1x8x1xf32>,
    return
  }
  func.func @transform_0(%arg0: i32) -> (i32, i32, i32) {
    %c0_i32 = arith.constant 0 : i32
    %c0_i32_0 = arith.constant 0 : i32
    %c0_i32_1 = arith.constant 0 : i32
    return %arg0, %c0_i32, %c0_i32_0 : i32, i32, i32
  }
  func.func @transform_1(%arg0: i32) -> (i32, i32) {
    %c0_i32 = arith.constant 0 : i32
    %c0_i32_0 = arith.constant 0 : i32
    %c0_i32_1 = arith.constant 0 : i32
    return %c0_i32, %c0_i32_0 : i32, i32
  }
  func.func @transform_2(%arg0: i32) -> (i32, i32) {
    %c0_i32 = arith.constant 0 : i32
    %c0_i32_0 = arith.constant 0 : i32
    %c0_i32_1 = arith.constant 0 : i32
    return %c0_i32, %c0_i32_0 : i32, i32
  }
  func.func @transform_3(%arg0: i32) -> (i32, i32, i32) {
    %c0_i32 = arith.constant 0 : i32
    %c0_i32_0 = arith.constant 0 : i32
    %c0_i32_1 = arith.constant 0 : i32
    return %arg0, %c0_i32, %c0_i32_0 : i32, i32, i32
  }
  func.func @transform_4(%arg0: i32) -> (i32, i32, i32) {
    %c0_i32 = arith.constant 0 : i32
    %c0_i32_0 = arith.constant 0 : i32
    %c0_i32_1 = arith.constant 0 : i32
    return %arg0, %c0_i32, %c0_i32_0 : i32, i32, i32
  }
}

module attributes {stable_mosaic.version = 11 : i64} {
  func.func @_bnrelu_conv_stats_kernel(%arg0: i32, %arg1: memref<1x8x256xf32, #tpu.memory_space<vmem>>, %arg2: memref<8x1xf32, #tpu.memory_space<vmem>>, %arg3: memref<8x1xf32, #tpu.memory_space<vmem>>, %arg4: memref<8x72xf32, #tpu.memory_space<vmem>>, %arg5: memref<8x1xf32, #tpu.memory_space<vmem>>, %arg6: memref<1x8x256xf32, #tpu.memory_space<vmem>>, %arg7: memref<1x8x2xf32, #tpu.memory_space<vmem>>, %arg8: memref<8x290xf32, #tpu.memory_space<vmem>>, %arg9: memref<72x256xf32, #tpu.memory_space<vmem>>) attributes {dimension_semantics = [#tpu.dimension_semantics<parallel>], iteration_bounds = array<i64: 2>, scalar_prefetch = 0 : i64, scratch_operands = 2 : i64, tpu.core_type = #tpu.core_type<tc>, window_params = [{transform_indices = @transform_0, window_bounds = array<i64: 1, 8, 256>}, {pipeline_mode = #tpu.pipeline_mode<synchronous>, transform_indices = @transform_1, window_bounds = array<i64: 8, 1>}, {pipeline_mode = #tpu.pipeline_mode<synchronous>, transform_indices = @transform_2, window_bounds = array<i64: 8, 1>}, {pipeline_mode = #tpu.pipeline_mode<synchronous>, transform_indices = @transform_3, window_bounds = array<i64: 8, 72>}, {pipeline_mode = #tpu.pipeline_mode<synchronous>, transform_indices = @transform_4, window_bounds = array<i64: 8, 1>}, {transform_indices = @transform_5, window_bounds = array<i64: 1, 8, 256>}, {transform_indices = @transform_6, window_bounds = array<i64: 1, 8, 2>}]} {
    %c0 = arith.constant 0 : index
    %c0_0 = arith.constant 0 : index
    %c0_1 = arith.constant 0 : index
    %0 = vector.load %arg1[%c0, %c0_0, %c0_1] : memref<1x8x256xf32, #tpu.memory_space<vmem>>, vector<1x8x256xf32>
    %1 = vector.shape_cast %0 : vector<1x8x256xf32> to vector<8x256xf32>
    %c0_2 = arith.constant 0 : index
    %c0_3 = arith.constant 0 : index
    %2 = vector.load %arg2[%c0_2, %c0_3] : memref<8x1xf32, #tpu.memory_space<vmem>>, vector<8x1xf32>
    %3 = vector.broadcast %2 : vector<8x1xf32> to vector<8x256xf32>
    %4 = arith.mulf %1, %3 : vector<8x256xf32>
    %c0_4 = arith.constant 0 : index
    %c0_5 = arith.constant 0 : index
    %5 = vector.load %arg3[%c0_4, %c0_5] : memref<8x1xf32, #tpu.memory_space<vmem>>, vector<8x1xf32>
    %6 = vector.broadcast %5 : vector<8x1xf32> to vector<8x256xf32>
    %7 = arith.addf %4, %6 : vector<8x256xf32>
    %cst = arith.constant 0.000000e+00 : f32
    %8 = vector.broadcast %cst : f32 to vector<8x256xf32>
    %9 = arith.maximumf %7, %8 : vector<8x256xf32>
    %cst_6 = arith.constant 0.000000e+00 : f32
    %10 = vector.broadcast %cst_6 : f32 to vector<8x17xf32>
    %c0_7 = arith.constant 0 : index
    %c0_8 = arith.constant 0 : index
    %11 = vector.load %arg8[%c0_7, %c0_8] : memref<8x290xf32, #tpu.memory_space<vmem>>, vector<8x17xf32>
    tpu.vector_store %arg8[%c0_7, %c0_8], %10 {strides = array<i32>} : memref<8x290xf32, #tpu.memory_space<vmem>>, vector<8x17xf32>,
    %cst_9 = arith.constant 0.000000e+00 : f32
    %12 = vector.broadcast %cst_9 : f32 to vector<8x17xf32>
    %c0_10 = arith.constant 0 : index
    %c273 = arith.constant 273 : index
    %13 = vector.load %arg8[%c0_10, %c273] : memref<8x290xf32, #tpu.memory_space<vmem>>, vector<8x17xf32>
    tpu.vector_store %arg8[%c0_10, %c273], %12 {strides = array<i32>} : memref<8x290xf32, #tpu.memory_space<vmem>>, vector<8x17xf32>,
    %c0_11 = arith.constant 0 : index
    %c17 = arith.constant 17 : index
    %14 = vector.load %arg8[%c0_11, %c17] : memref<8x290xf32, #tpu.memory_space<vmem>>, vector<8x256xf32>
    tpu.vector_store %arg8[%c0_11, %c17], %9 {strides = array<i32>} : memref<8x290xf32, #tpu.memory_space<vmem>>, vector<8x256xf32>,
    %15 = tpu.iota {dimensions = array<i32: 1>} : vector<1x256xi32>
    %c16_i32 = arith.constant 16 : i32
    %c0_i32 = arith.constant 0 : i32
    %16 = arith.cmpi eq, %c16_i32, %c0_i32 : i32
    %c1_i32 = arith.constant 1 : i32
    %17 = arith.select %16, %c1_i32, %c16_i32 : i32
    %18 = vector.broadcast %17 : i32 to vector<1x256xi32>
    %19 = arith.remsi %15, %18 : vector<1x256xi32>
    %c0_i32_12 = arith.constant 0 : i32
    %20 = vector.broadcast %c0_i32_12 : i32 to vector<1x256xi32>
    %21 = arith.cmpi ne, %19, %20 : vector<1x256xi32>
    %c0_i32_13 = arith.constant 0 : i32
    %22 = vector.broadcast %c0_i32_13 : i32 to vector<1x256xi32>
    %23 = arith.cmpi slt, %19, %22 : vector<1x256xi32>
    %c0_i32_14 = arith.constant 0 : i32
    %24 = arith.cmpi slt, %17, %c0_i32_14 : i32
    %25 = vector.broadcast %24 : i1 to vector<1x256xi1>
    %26 = vector.broadcast %25 : vector<1x256xi1> to vector<1x256xi1>
    %27 = arith.xori %23, %26 : vector<1x256xi1>
    %28 = arith.andi %27, %21 : vector<1x256xi1>
    %29 = vector.broadcast %17 : i32 to vector<1x256xi32>
    %30 = arith.addi %19, %29 : vector<1x256xi32>
    %31 = arith.select %28, %30, %19 : vector<1x256xi1>, vector<1x256xi32>
    %c1_i32_15 = arith.constant 1 : i32
    %32 = vector.broadcast %c1_i32_15 : i32 to vector<1x256xi32>
    %33 = arith.cmpi sge, %31, %32 : vector<1x256xi32>
    %34 = arith.extui %33 : vector<1x256xi1> to vector<1x256xi32>
    %35 = arith.sitofp %34 : vector<1x256xi32> to vector<1x256xf32>
    %c14_i32 = arith.constant 14 : i32
    %36 = vector.broadcast %c14_i32 : i32 to vector<1x256xi32>
    %37 = arith.cmpi sle, %31, %36 : vector<1x256xi32>
    %38 = arith.extui %37 : vector<1x256xi1> to vector<1x256xi32>
    %39 = arith.sitofp %38 : vector<1x256xi32> to vector<1x256xf32>
    %c0_16 = arith.constant 0 : index
    %c0_17 = arith.constant 0 : index
    %40 = vector.load %arg8[%c0_16, %c0_17] : memref<8x290xf32, #tpu.memory_space<vmem>>, vector<8x256xf32>
    %41 = vector.broadcast %35 : vector<1x256xf32> to vector<8x256xf32>
    %42 = arith.mulf %40, %41 : vector<8x256xf32>
    %c0_18 = arith.constant 0 : index
    %c0_19 = arith.constant 0 : index
    %43 = vector.load %arg9[%c0_18, %c0_19] : memref<72x256xf32, #tpu.memory_space<vmem>>, vector<8x256xf32>
    tpu.vector_store %arg9[%c0_18, %c0_19], %42 {strides = array<i32>} : memref<72x256xf32, #tpu.memory_space<vmem>>, vector<8x256xf32>,
    %c0_20 = arith.constant 0 : index
    %c1 = arith.constant 1 : index
    %44 = vector.load %arg8[%c0_20, %c1] : memref<8x290xf32, #tpu.memory_space<vmem>>, vector<8x256xf32>
    %c8 = arith.constant 8 : index
    %c0_21 = arith.constant 0 : index
    %45 = vector.load %arg9[%c8, %c0_21] : memref<72x256xf32, #tpu.memory_space<vmem>>, vector<8x256xf32>
    tpu.vector_store %arg9[%c8, %c0_21], %44 {strides = array<i32>} : memref<72x256xf32, #tpu.memory_space<vmem>>, vector<8x256xf32>,
    %c0_22 = arith.constant 0 : index
    %c2 = arith.constant 2 : index
    %46 = vector.load %arg8[%c0_22, %c2] : memref<8x290xf32, #tpu.memory_space<vmem>>, vector<8x256xf32>
    %47 = vector.broadcast %39 : vector<1x256xf32> to vector<8x256xf32>
    %48 = arith.mulf %46, %47 : vector<8x256xf32>
    %c16 = arith.constant 16 : index
    %c0_23 = arith.constant 0 : index
    %49 = vector.load %arg9[%c16, %c0_23] : memref<72x256xf32, #tpu.memory_space<vmem>>, vector<8x256xf32>
    tpu.vector_store %arg9[%c16, %c0_23], %48 {strides = array<i32>} : memref<72x256xf32, #tpu.memory_space<vmem>>, vector<8x256xf32>,
    %c0_24 = arith.constant 0 : index
    %c16_25 = arith.constant 16 : index
    %50 = vector.load %arg8[%c0_24, %c16_25] : memref<8x290xf32, #tpu.memory_space<vmem>>, vector<8x256xf32>
    %51 = vector.broadcast %35 : vector<1x256xf32> to vector<8x256xf32>
    %52 = arith.mulf %50, %51 : vector<8x256xf32>
    %c24 = arith.constant 24 : index
    %c0_26 = arith.constant 0 : index
    %53 = vector.load %arg9[%c24, %c0_26] : memref<72x256xf32, #tpu.memory_space<vmem>>, vector<8x256xf32>
    tpu.vector_store %arg9[%c24, %c0_26], %52 {strides = array<i32>} : memref<72x256xf32, #tpu.memory_space<vmem>>, vector<8x256xf32>,
    %c0_27 = arith.constant 0 : index
    %c17_28 = arith.constant 17 : index
    %54 = vector.load %arg8[%c0_27, %c17_28] : memref<8x290xf32, #tpu.memory_space<vmem>>, vector<8x256xf32>
    %c32 = arith.constant 32 : index
    %c0_29 = arith.constant 0 : index
    %55 = vector.load %arg9[%c32, %c0_29] : memref<72x256xf32, #tpu.memory_space<vmem>>, vector<8x256xf32>
    tpu.vector_store %arg9[%c32, %c0_29], %54 {strides = array<i32>} : memref<72x256xf32, #tpu.memory_space<vmem>>, vector<8x256xf32>,
    %c0_30 = arith.constant 0 : index
    %c18 = arith.constant 18 : index
    %56 = vector.load %arg8[%c0_30, %c18] : memref<8x290xf32, #tpu.memory_space<vmem>>, vector<8x256xf32>
    %57 = vector.broadcast %39 : vector<1x256xf32> to vector<8x256xf32>
    %58 = arith.mulf %56, %57 : vector<8x256xf32>
    %c40 = arith.constant 40 : index
    %c0_31 = arith.constant 0 : index
    %59 = vector.load %arg9[%c40, %c0_31] : memref<72x256xf32, #tpu.memory_space<vmem>>, vector<8x256xf32>
    tpu.vector_store %arg9[%c40, %c0_31], %58 {strides = array<i32>} : memref<72x256xf32, #tpu.memory_space<vmem>>, vector<8x256xf32>,
    %c0_32 = arith.constant 0 : index
    %c32_33 = arith.constant 32 : index
    %60 = vector.load %arg8[%c0_32, %c32_33] : memref<8x290xf32, #tpu.memory_space<vmem>>, vector<8x256xf32>
    %61 = vector.broadcast %35 : vector<1x256xf32> to vector<8x256xf32>
    %62 = arith.mulf %60, %61 : vector<8x256xf32>
    %c48 = arith.constant 48 : index
    %c0_34 = arith.constant 0 : index
    %63 = vector.load %arg9[%c48, %c0_34] : memref<72x256xf32, #tpu.memory_space<vmem>>, vector<8x256xf32>
    tpu.vector_store %arg9[%c48, %c0_34], %62 {strides = array<i32>} : memref<72x256xf32, #tpu.memory_space<vmem>>, vector<8x256xf32>,
    %c0_35 = arith.constant 0 : index
    %c33 = arith.constant 33 : index
    %64 = vector.load %arg8[%c0_35, %c33] : memref<8x290xf32, #tpu.memory_space<vmem>>, vector<8x256xf32>
    %c56 = arith.constant 56 : index
    %c0_36 = arith.constant 0 : index
    %65 = vector.load %arg9[%c56, %c0_36] : memref<72x256xf32, #tpu.memory_space<vmem>>, vector<8x256xf32>
    tpu.vector_store %arg9[%c56, %c0_36], %64 {strides = array<i32>} : memref<72x256xf32, #tpu.memory_space<vmem>>, vector<8x256xf32>,
    %c0_37 = arith.constant 0 : index
    %c34 = arith.constant 34 : index
    %66 = vector.load %arg8[%c0_37, %c34] : memref<8x290xf32, #tpu.memory_space<vmem>>, vector<8x256xf32>
    %67 = vector.broadcast %39 : vector<1x256xf32> to vector<8x256xf32>
    %68 = arith.mulf %66, %67 : vector<8x256xf32>
    %c64 = arith.constant 64 : index
    %c0_38 = arith.constant 0 : index
    %69 = vector.load %arg9[%c64, %c0_38] : memref<72x256xf32, #tpu.memory_space<vmem>>, vector<8x256xf32>
    tpu.vector_store %arg9[%c64, %c0_38], %68 {strides = array<i32>} : memref<72x256xf32, #tpu.memory_space<vmem>>, vector<8x256xf32>,
    %c0_39 = arith.constant 0 : index
    %c0_40 = arith.constant 0 : index
    %70 = vector.load %arg4[%c0_39, %c0_40] : memref<8x72xf32, #tpu.memory_space<vmem>>, vector<8x72xf32>
    %c0_41 = arith.constant 0 : index
    %c0_42 = arith.constant 0 : index
    %71 = vector.load %arg9[%c0_41, %c0_42] : memref<72x256xf32, #tpu.memory_space<vmem>>, vector<72x256xf32>
    %cst_43 = arith.constant dense<0.000000e+00> : vector<8x256xf32>
    %72 = tpu.matmul %70, %71, %cst_43 {dimension_numbers = #tpu.dot_dimension_numbers<[1], [0], [0], [1], [0, 0, 1, 1], [], []>} : vector<8x72xf32>, vector<72x256xf32>, vector<8x256xf32> -> vector<8x256xf32>
    %c0_44 = arith.constant 0 : index
    %c0_45 = arith.constant 0 : index
    %73 = vector.load %arg5[%c0_44, %c0_45] : memref<8x1xf32, #tpu.memory_space<vmem>>, vector<8x1xf32>
    %74 = vector.broadcast %73 : vector<8x1xf32> to vector<8x256xf32>
    %75 = arith.addf %72, %74 : vector<8x256xf32>
    %c0_46 = arith.constant 0 : index
    %c0_47 = arith.constant 0 : index
    %c0_48 = arith.constant 0 : index
    %76 = vector.load %arg6[%c0_46, %c0_47, %c0_48] : memref<1x8x256xf32, #tpu.memory_space<vmem>>, vector<1x8x256xf32>
    %77 = vector.shape_cast %76 : vector<1x8x256xf32> to vector<8x256xf32>
    %78 = vector.shape_cast %75 : vector<8x256xf32> to vector<1x8x256xf32>
    tpu.vector_store %arg6[%c0_46, %c0_47, %c0_48], %78 {strides = array<i32>} : memref<1x8x256xf32, #tpu.memory_space<vmem>>, vector<1x8x256xf32>,
    %cst_49 = arith.constant dense<0.000000e+00> : vector<8xf32>
    %79 = vector.multi_reduction <add>, %75, %cst_49 [1] : vector<8x256xf32> to vector<8xf32>
    %80 = vector.shape_cast %79 : vector<8xf32> to vector<8x1xf32>
    %c0_50 = arith.constant 0 : index
    %c0_51 = arith.constant 0 : index
    %c0_52 = arith.constant 0 : index
    %81 = vector.load %arg7[%c0_50, %c0_51, %c0_52] : memref<1x8x2xf32, #tpu.memory_space<vmem>>, vector<1x8x1xf32>
    %82 = vector.shape_cast %81 : vector<1x8x1xf32> to vector<8x1xf32>
    %83 = vector.shape_cast %80 : vector<8x1xf32> to vector<1x8x1xf32>
    tpu.vector_store %arg7[%c0_50, %c0_51, %c0_52], %83 {strides = array<i32>} : memref<1x8x2xf32, #tpu.memory_space<vmem>>, vector<1x8x1xf32>,
    %84 = arith.mulf %75, %75 : vector<8x256xf32>
    %cst_53 = arith.constant dense<0.000000e+00> : vector<8xf32>
    %85 = vector.multi_reduction <add>, %84, %cst_53 [1] : vector<8x256xf32> to vector<8xf32>
    %86 = vector.shape_cast %85 : vector<8xf32> to vector<8x1xf32>
    %c0_54 = arith.constant 0 : index
    %c0_55 = arith.constant 0 : index
    %c1_56 = arith.constant 1 : index
    %87 = vector.load %arg7[%c0_54, %c0_55, %c1_56] : memref<1x8x2xf32, #tpu.memory_space<vmem>>, vector<1x8x1xf32>
    %88 = vector.shape_cast %87 : vector<1x8x1xf32> to vector<8x1xf32>
    %89 = vector.shape_cast %86 : vector<8x1xf32> to vector<1x8x1xf32>
    tpu.vector_store %arg7[%c0_54, %c0_55, %c1_56], %89 {strides = array<i32>} : memref<1x8x2xf32, #tpu.memory_space<vmem>>, vector<1x8x1xf32>,
    return
  }
  func.func @transform_0(%arg0: i32) -> (i32, i32, i32) {
    %c0_i32 = arith.constant 0 : i32
    %c0_i32_0 = arith.constant 0 : i32
    %c0_i32_1 = arith.constant 0 : i32
    return %arg0, %c0_i32, %c0_i32_0 : i32, i32, i32
  }
  func.func @transform_1(%arg0: i32) -> (i32, i32) {
    %c0_i32 = arith.constant 0 : i32
    %c0_i32_0 = arith.constant 0 : i32
    %c0_i32_1 = arith.constant 0 : i32
    return %c0_i32, %c0_i32_0 : i32, i32
  }
  func.func @transform_2(%arg0: i32) -> (i32, i32) {
    %c0_i32 = arith.constant 0 : i32
    %c0_i32_0 = arith.constant 0 : i32
    %c0_i32_1 = arith.constant 0 : i32
    return %c0_i32, %c0_i32_0 : i32, i32
  }
  func.func @transform_3(%arg0: i32) -> (i32, i32) {
    %c0_i32 = arith.constant 0 : i32
    %c0_i32_0 = arith.constant 0 : i32
    %c0_i32_1 = arith.constant 0 : i32
    return %c0_i32, %c0_i32_0 : i32, i32
  }
  func.func @transform_4(%arg0: i32) -> (i32, i32) {
    %c0_i32 = arith.constant 0 : i32
    %c0_i32_0 = arith.constant 0 : i32
    %c0_i32_1 = arith.constant 0 : i32
    return %c0_i32, %c0_i32_0 : i32, i32
  }
  func.func @transform_5(%arg0: i32) -> (i32, i32, i32) {
    %c0_i32 = arith.constant 0 : i32
    %c0_i32_0 = arith.constant 0 : i32
    %c0_i32_1 = arith.constant 0 : i32
    return %arg0, %c0_i32, %c0_i32_0 : i32, i32, i32
  }
  func.func @transform_6(%arg0: i32) -> (i32, i32, i32) {
    %c0_i32 = arith.constant 0 : i32
    %c0_i32_0 = arith.constant 0 : i32
    %c0_i32_1 = arith.constant 0 : i32
    return %arg0, %c0_i32, %c0_i32_0 : i32, i32, i32
  }
}

module attributes {stable_mosaic.version = 11 : i64} {
  func.func @_bnrelu_kernel(%arg0: i32, %arg1: memref<1x8x256xf32, #tpu.memory_space<vmem>>, %arg2: memref<8x1xf32, #tpu.memory_space<vmem>>, %arg3: memref<8x1xf32, #tpu.memory_space<vmem>>, %arg4: memref<1x8x256xf32, #tpu.memory_space<vmem>>) attributes {dimension_semantics = [#tpu.dimension_semantics<parallel>], iteration_bounds = array<i64: 2>, scalar_prefetch = 0 : i64, scratch_operands = 0 : i64, tpu.core_type = #tpu.core_type<tc>, window_params = [{transform_indices = @transform_0, window_bounds = array<i64: 1, 8, 256>}, {pipeline_mode = #tpu.pipeline_mode<synchronous>, transform_indices = @transform_1, window_bounds = array<i64: 8, 1>}, {pipeline_mode = #tpu.pipeline_mode<synchronous>, transform_indices = @transform_2, window_bounds = array<i64: 8, 1>}, {transform_indices = @transform_3, window_bounds = array<i64: 1, 8, 256>}]} {
    %c0 = arith.constant 0 : index
    %c0_0 = arith.constant 0 : index
    %c0_1 = arith.constant 0 : index
    %0 = vector.load %arg1[%c0, %c0_0, %c0_1] : memref<1x8x256xf32, #tpu.memory_space<vmem>>, vector<1x8x256xf32>
    %1 = vector.shape_cast %0 : vector<1x8x256xf32> to vector<8x256xf32>
    %c0_2 = arith.constant 0 : index
    %c0_3 = arith.constant 0 : index
    %2 = vector.load %arg2[%c0_2, %c0_3] : memref<8x1xf32, #tpu.memory_space<vmem>>, vector<8x1xf32>
    %3 = vector.broadcast %2 : vector<8x1xf32> to vector<8x256xf32>
    %4 = arith.mulf %1, %3 : vector<8x256xf32>
    %c0_4 = arith.constant 0 : index
    %c0_5 = arith.constant 0 : index
    %5 = vector.load %arg3[%c0_4, %c0_5] : memref<8x1xf32, #tpu.memory_space<vmem>>, vector<8x1xf32>
    %6 = vector.broadcast %5 : vector<8x1xf32> to vector<8x256xf32>
    %7 = arith.addf %4, %6 : vector<8x256xf32>
    %cst = arith.constant 0.000000e+00 : f32
    %8 = vector.broadcast %cst : f32 to vector<8x256xf32>
    %9 = arith.maximumf %7, %8 : vector<8x256xf32>
    %c0_6 = arith.constant 0 : index
    %c0_7 = arith.constant 0 : index
    %c0_8 = arith.constant 0 : index
    %10 = vector.load %arg4[%c0_6, %c0_7, %c0_8] : memref<1x8x256xf32, #tpu.memory_space<vmem>>, vector<1x8x256xf32>
    %11 = vector.shape_cast %10 : vector<1x8x256xf32> to vector<8x256xf32>
    %12 = vector.shape_cast %9 : vector<8x256xf32> to vector<1x8x256xf32>
    tpu.vector_store %arg4[%c0_6, %c0_7, %c0_8], %12 {strides = array<i32>} : memref<1x8x256xf32, #tpu.memory_space<vmem>>, vector<1x8x256xf32>,
    return
  }
  func.func @transform_0(%arg0: i32) -> (i32, i32, i32) {
    %c0_i32 = arith.constant 0 : i32
    %c0_i32_0 = arith.constant 0 : i32
    %c0_i32_1 = arith.constant 0 : i32
    return %arg0, %c0_i32, %c0_i32_0 : i32, i32, i32
  }
  func.func @transform_1(%arg0: i32) -> (i32, i32) {
    %c0_i32 = arith.constant 0 : i32
    %c0_i32_0 = arith.constant 0 : i32
    %c0_i32_1 = arith.constant 0 : i32
    return %c0_i32, %c0_i32_0 : i32, i32
  }
  func.func @transform_2(%arg0: i32) -> (i32, i32) {
    %c0_i32 = arith.constant 0 : i32
    %c0_i32_0 = arith.constant 0 : i32
    %c0_i32_1 = arith.constant 0 : i32
    return %c0_i32, %c0_i32_0 : i32, i32
  }
  func.func @transform_3(%arg0: i32) -> (i32, i32, i32) {
    %c0_i32 = arith.constant 0 : i32
    %c0_i32_0 = arith.constant 0 : i32
    %c0_i32_1 = arith.constant 0 : i32
    return %arg0, %c0_i32, %c0_i32_0 : i32, i32, i32
  }
}

</mosaic_0001>

<llo_original>
// kernel: double_conv.5
$region0: #{double_conv.5}
  #allocation0 [shape = 'u32[]', space=smem, size = 0x4, offset = 0x4, fixed_abs, tag = 'smem constant byte address 0x4 - core index']
  #allocation1 [shape = 'u32[144,128]{1,0:T(1,128)}', space=vmem, size = 0x12000, scoped, tag = 'internal scratch']
  %s0 = inlined_call_operand.vmem [shape: f32[2,8,256], index: 0, kind: input, shape index: {}]
  %s1 = inlined_call_operand.vmem [shape: f32[8,1], index: 1, kind: input, shape index: {}]
  %s2 = inlined_call_operand.vmem [shape: f32[8,1], index: 2, kind: input, shape index: {}]
  %s3 = inlined_call_operand.vmem [shape: f32[2,8,256], index: 3, kind: output, shape index: {}]
  %s4 = sld [smem:[#allocation0]]
  $region45: #{double_conv.5} parent=0
    _
  %s6 = ssub.s32 1, %s4
  %s7 = scalar_select 0, %s6, %s4
  loop: start=0, step=1, limit=4
  $region2: #{double_conv.5} parent=0 // loop_pre_header
    _
  $region3: #{double_conv.5} parent=0 // loop_header
    %s9 = sphi 0, %s13
    %p10 = scmp.ge.s32.totalorder %s9, 4
    %s19 = sphi 0, %s21
    %s22 = sphi 0, %s19
    %s23 = sphi 0, %s22
    %s39 = sphi 0, %s23
    %s43 = sphi 0, %s43
    %s45 = sphi 0, %s43
    %s46 = sphi 0, %s45
    %s60 = sphi 0, %s46
    %s64 = sphi 0, %s64
    %s66 = sphi 0, %s64
    %s67 = sphi 0, %s66
    %s81 = sphi 0, %s67
    %s87 = sphi 0, %s89
    %s90 = sphi 0, %s87
    %s91 = sphi 0, %s90
    %s107 = sphi 0, %s91
  $region4: #{double_conv.5} parent=0 // loop_header_branch
    %12 = sbr.rel (%p10) target = $region8
  $region5: #{double_conv.5} parent=0 // loop_body
    %s14 = ssub.s32 %s9, 1
    %s15 = ssub.s32 %s9, 2
    %s16 = sadd.s32 %s9, 1
    %s17 = ssub.s32 %s9, %s16
    %p18 = scmp.eq.s32.totalorder %s17, 0
    %s20 = sadd.s32 %s19, 1
    %s21 = scalar_select %p18, %s19, %s20
    %p24 = pneg %p18
    %p25 = scmp.eq.s32.totalorder %s9, 1
    %p26 = por %p24, %p25
    %p27 = scmp.ne.s32.totalorder %s19, %s22
    %p28 = scmp.eq.s32.totalorder %s9, 0
    %p29 = por %p27, %p28
    %p30 = scmp.ne.s32.totalorder %s19, %s22
    %p31 = scmp.eq.s32.totalorder %s14, 1
    %p32 = por %p30, %p31
    %p33 = scmp.ne.s32.totalorder %s22, %s23
    %p34 = scmp.eq.s32.totalorder %s14, 0
    %p35 = por %p33, %p34
    %p36 = scmp.ne.s32.totalorder %s22, %s23
    %p37 = scmp.eq.s32.totalorder %s15, 1
    %p38 = por %p36, %p37
    %p40 = scmp.ne.s32.totalorder %s23, %s39
    %p41 = scmp.eq.s32.totalorder %s15, 0
    %p42 = por %p40, %p41
    %s44 = sadd.s32 %s43, 1
    %p47 = scmp.eq.s32.totalorder %s9, 1
    %p48 = scmp.ne.s32.totalorder %s43, %s45
    %p49 = scmp.eq.s32.totalorder %s9, 0
    %p50 = por %p48, %p49
    %p51 = scmp.ne.s32.totalorder %s43, %s45
    %p52 = scmp.eq.s32.totalorder %s14, 1
    %p53 = por %p51, %p52
    %p54 = scmp.ne.s32.totalorder %s45, %s46
    %p55 = scmp.eq.s32.totalorder %s14, 0
    %p56 = por %p54, %p55
    %p57 = scmp.ne.s32.totalorder %s45, %s46
    %p58 = scmp.eq.s32.totalorder %s15, 1
    %p59 = por %p57, %p58
    %p61 = scmp.ne.s32.totalorder %s46, %s60
    %p62 = scmp.eq.s32.totalorder %s15, 0
    %p63 = por %p61, %p62
    %s65 = sadd.s32 %s64, 1
    %p68 = scmp.eq.s32.totalorder %s9, 1
    %p69 = scmp.ne.s32.totalorder %s64, %s66
    %p70 = scmp.eq.s32.totalorder %s9, 0
    %p71 = por %p69, %p70
    %p72 = scmp.ne.s32.totalorder %s64, %s66
    %p73 = scmp.eq.s32.totalorder %s14, 1
    %p74 = por %p72, %p73
    %p75 = scmp.ne.s32.totalorder %s66, %s67
    %p76 = scmp.eq.s32.totalorder %s14, 0
    %p77 = por %p75, %p76
    %p78 = scmp.ne.s32.totalorder %s66, %s67
    %p79 = scmp.eq.s32.totalorder %s15, 1
    %p80 = por %p78, %p79
    %p82 = scmp.ne.s32.totalorder %s67, %s81
    %p83 = scmp.eq.s32.totalorder %s15, 0
    %p84 = por %p82, %p83
    %s85 = ssub.s32 %s9, %s16
    %p86 = scmp.eq.s32.totalorder %s85, 0
    %s88 = sadd.s32 %s87, 1
    %s89 = scalar_select %p86, %s87, %s88
    %p92 = pneg %p86
    %p93 = scmp.eq.s32.totalorder %s9, 1
    %p94 = por %p92, %p93
    %p95 = scmp.ne.s32.totalorder %s87, %s90
    %p96 = scmp.eq.s32.totalorder %s9, 0
    %p97 = por %p95, %p96
    %p98 = scmp.ne.s32.totalorder %s87, %s90
    %p99 = scmp.eq.s32.totalorder %s14, 1
    %p100 = por %p98, %p99
    %p101 = scmp.ne.s32.totalorder %s90, %s91
    %p102 = scmp.eq.s32.totalorder %s14, 0
    %p103 = por %p101, %p102
    %p104 = scmp.ne.s32.totalorder %s90, %s91
    %p105 = scmp.eq.s32.totalorder %s15, 1
    %p106 = por %p104, %p105
    %p108 = scmp.ne.s32.totalorder %s91, %s107
    %p109 = scmp.eq.s32.totalorder %s15, 0
    %p110 = por %p108, %p109
    %p111 = scmp.le.s32.totalorder 1, %s9
    %p112 = scmp.lt.s32.totalorder %s9, 3
    %p113 = pnand %p111, %p112
    %p114 = pneg %p113
    // Predicated region
    $region9: #{double_conv.5} parent=5 // pred_check
      _
    $region10: #{double_conv.5} parent=5 // pred_check_branch
      %116 = sbr.rel (%p113) target = $region12
    $region11: #{double_conv.5} parent=5 // pred_region
      %s117 = ssub.s32 %s9, 1
      // Predicated region
      $region13: #{double_conv.5} parent=11 // pred_check
        %p118 = pneg %p56
      $region14: #{double_conv.5} parent=11 // pred_check_branch
        %120 = sbr.rel (%p118) target = $region16
      $region15: #{double_conv.5} parent=11 // pred_region
        _
      $region16: #{double_conv.5} parent=11 // pred_fallthru
        _
      // Predicated region
      $region17: #{double_conv.5} parent=11 // pred_check
        %p121 = pneg %p77
      $region18: #{double_conv.5} parent=11 // pred_check_branch
        %123 = sbr.rel (%p121) target = $region20
      $region19: #{double_conv.5} parent=11 // pred_region
        _
      $region20: #{double_conv.5} parent=11 // pred_fallthru
        _
    $region12: #{double_conv.5} parent=5 // pred_fallthru
      _
    %p124 = scmp.lt.s32.totalorder %s9, 2
    // Predicated region
    $region21: #{double_conv.5} parent=5 // pred_check
      %p125 = pneg %p124
    $region22: #{double_conv.5} parent=5 // pred_check_branch
      %127 = sbr.rel (%p125) target = $region24
    $region23: #{double_conv.5} parent=5 // pred_region
      // Predicated region
      $region25: #{double_conv.5} parent=23 // pred_check
        %p128 = pneg %p29
      $region26: #{double_conv.5} parent=23 // pred_check_branch
        %130 = sbr.rel (%p128) target = $region28
      $region27: #{double_conv.5} parent=23 // pred_region
        %p131 = scmp.lt.s32.totalorder %s9, 1
        %s132 = scalar_select %p131, %s9, 1
        %s133 = smul.addr %s132, 2
        %s134 = smul.addr %s133, 8
        %s135 = scalar_lea.vmem %s0, %s134
      $region28: #{double_conv.5} parent=23 // pred_fallthru
        _
    $region24: #{double_conv.5} parent=5 // pred_fallthru
      _
    %p136 = scmp.le.s32.totalorder 1, %s9
    %p137 = scmp.lt.s32.totalorder %s9, 3
    %p138 = pnand %p136, %p137
    %p139 = pneg %p138
    // Predicated region
    $region29: #{double_conv.5} parent=5 // pred_check
      _
    $region30: #{double_conv.5} parent=5 // pred_check_branch
      %141 = sbr.rel (%p138) target = $region32
    $region31: #{double_conv.5} parent=5 // pred_region
      %s142 = ssub.s32 %s9, 1
      %p143 = scmp.lt.s32.totalorder %s14, 1
      %s144 = scalar_select %p143, %s14, 1
      %s145 = smul.addr %s144, 2
      %s146 = smul.addr %s145, 8
      %s147 = scalar_lea.vmem %s0, %s146
      %p148 = pneg %p35
      %p149 = pneg %p32
      %p150 = pneg %p56
      %p151 = pneg %p53
      %p152 = pneg %p77
      %p153 = pneg %p74
      %p154 = pneg %p103
      %p155 = pneg %p100
      %p156 = scmp.lt.s32.totalorder %s14, 1
      %s157 = scalar_select %p156, %s14, 1
      %s158 = smul.addr %s157, 2
      %s159 = smul.addr %s158, 8
      %s160 = scalar_lea.vmem %s3, %s159
      %p161 = scmp.lt.s32.totalorder %s14, 1
      %s162 = scalar_select %p161, %s14, 1
      %s163 = smul.addr %s162, 2
      %s164 = smul.addr %s163, 8
      %s165 = scalar_lea.vmem %s0, %s164
      %p166 = scmp.lt.s32.totalorder %s14, 1
      %s167 = scalar_select %p166, %s14, 1
      %s168 = smul.addr %s167, 2
      %s169 = smul.addr %s168, 8
      %s170 = scalar_lea.vmem %s3, %s169
      %v171 = vld [vmem:[%s165] sm:$0xff]
      %v172 = vld [vmem:[%s165 + $0x8] sm:$0xff]
      %v173 = vld [vmem:[%s1] sm:$0xff]
      %175 = vset.pattern.permute.xlu0 0
      %176 = vperm.xlu0 %175, %v173
      %v177 = vpop.permute.xlu0 %176
      %v179 = vmul.f32 %v171, %v177
      %v180 = vmul.f32 %v172, %v177
      %v181 = vld [vmem:[%s2] sm:$0xff]
      %183 = vset.pattern.permute.xlu0 0
      %184 = vperm.xlu0 %183, %v181
      %v185 = vpop.permute.xlu0 %184
      %v187 = vadd.f32 %v179, %v185
      %v188 = vadd.f32 %v180, %v185
      %v189 = vmax.f32 %v187, 0.0
      %v190 = vmax.f32 %v188, 0.0
      %191 = vst [vmem:[%s170] sm:$0xff] %v189
      %192 = vst [vmem:[%s170 + $0x8] sm:$0xff] %v190
      %p193 = scmp.lt.s32.totalorder %s14, 1
      %s194 = scalar_select %p193, %s14, 1
      %s195 = smul.addr %s194, 2
      %s196 = smul.addr %s195, 8
      %s197 = scalar_lea.vmem %s3, %s196
      // Predicated region
      $region33: #{double_conv.5} parent=31 // pred_check
        %p198 = pneg %p100
      $region34: #{double_conv.5} parent=31 // pred_check_branch
        %200 = sbr.rel (%p198) target = $region36
      $region35: #{double_conv.5} parent=31 // pred_region
        _
      $region36: #{double_conv.5} parent=31 // pred_fallthru
        _
    $region32: #{double_conv.5} parent=5 // pred_fallthru
      _
    %p201 = scmp.le.s32.totalorder 2, %s9
    // Predicated region
    $region37: #{double_conv.5} parent=5 // pred_check
      %p202 = pneg %p201
    $region38: #{double_conv.5} parent=5 // pred_check_branch
      %204 = sbr.rel (%p202) target = $region40
    $region39: #{double_conv.5} parent=5 // pred_region
      %s205 = ssub.s32 %s9, 2
      // Predicated region
      $region41: #{double_conv.5} parent=39 // pred_check
        %p206 = pneg %p106
      $region42: #{double_conv.5} parent=39 // pred_check_branch
        %208 = sbr.rel (%p206) target = $region44
      $region43: #{double_conv.5} parent=39 // pred_region
        %p209 = scmp.lt.s32.totalorder %s15, 1
        %s210 = scalar_select %p209, %s15, 1
        %s211 = smul.addr %s210, 2
        %s212 = smul.addr %s211, 8
        %s213 = scalar_lea.vmem %s3, %s212
      $region44: #{double_conv.5} parent=39 // pred_fallthru
        _
    $region40: #{double_conv.5} parent=5 // pred_fallthru
      _
  $region6: #{double_conv.5} parent=0 // loop_footer
    %s13 = sadd.s32 1, %s9
  $region7: #{double_conv.5} parent=0 // loop_footer_branch
    %8 = sbr.rel target = $region3
  $region8: #{double_conv.5} parent=0 // loop_exit
    _

// kernel: double_conv.4
$region0: #{double_conv.4}
  #allocation0 [shape = 'u32[]', space=smem, size = 0x4, offset = 0x4, fixed_abs, tag = 'smem constant byte address 0x4 - core index']
  #allocation1 [shape = 'u32[144,128]{1,0:T(1,128)}', space=vmem, size = 0x12000, scoped, tag = 'internal scratch']
  #allocation2 [shape = 'f32[8,290]{1,0:T(8,128)}', space=vmem, size = 0x3000, scoped, tag = 'scratch operand']
  #allocation3 [shape = 'f32[72,256]{1,0:T(8,128)}', space=vmem, size = 0x12000, scoped, tag = 'scratch operand']
  %s0 = inlined_call_operand.vmem [shape: f32[2,8,256], index: 0, kind: input, shape index: {}]
  %s1 = inlined_call_operand.vmem [shape: f32[8,1], index: 1, kind: input, shape index: {}]
  %s2 = inlined_call_operand.vmem [shape: f32[8,1], index: 2, kind: input, shape index: {}]
  %s3 = inlined_call_operand.vmem [shape: f32[8,72], index: 3, kind: input, shape index: {}]
  %s4 = inlined_call_operand.vmem [shape: f32[8,1], index: 4, kind: input, shape index: {}]
  %s5 = inlined_call_operand.vmem [shape: f32[2,8,256], index: 5, kind: output, shape index: {0}]
  %s6 = inlined_call_operand.vmem [shape: f32[2,8,2], index: 6, kind: output, shape index: {1}]
  %7 = xla_tuple %s5, %s6
  %s8 = sld [smem:[#allocation0]]
  $region61: #{double_conv.4} parent=0
    _
  %s10 = ssub.s32 1, %s8
  %s11 = scalar_select 0, %s10, %s8
  loop: start=0, step=1, limit=4
  $region2: #{double_conv.4} parent=0 // loop_pre_header
    _
  $region3: #{double_conv.4} parent=0 // loop_header
    %s13 = sphi 0, %s17
    %p14 = scmp.ge.s32.totalorder %s13, 4
    %s23 = sphi 0, %s25
    %s26 = sphi 0, %s23
    %s27 = sphi 0, %s26
    %s43 = sphi 0, %s27
    %s47 = sphi 0, %s47
    %s49 = sphi 0, %s47
    %s50 = sphi 0, %s49
    %s64 = sphi 0, %s50
    %s68 = sphi 0, %s68
    %s70 = sphi 0, %s68
    %s71 = sphi 0, %s70
    %s85 = sphi 0, %s71
    %s89 = sphi 0, %s89
    %s91 = sphi 0, %s89
    %s92 = sphi 0, %s91
    %s106 = sphi 0, %s92
    %s110 = sphi 0, %s110
    %s112 = sphi 0, %s110
    %s113 = sphi 0, %s112
    %s127 = sphi 0, %s113
    %s133 = sphi 0, %s135
    %s136 = sphi 0, %s133
    %s137 = sphi 0, %s136
    %s153 = sphi 0, %s137
    %s159 = sphi 0, %s161
    %s162 = sphi 0, %s159
    %s163 = sphi 0, %s162
    %s179 = sphi 0, %s163
  $region4: #{double_conv.4} parent=0 // loop_header_branch
    %16 = sbr.rel (%p14) target = $region8
  $region5: #{double_conv.4} parent=0 // loop_body
    %s18 = ssub.s32 %s13, 1
    %s19 = ssub.s32 %s13, 2
    %s20 = sadd.s32 %s13, 1
    %s21 = ssub.s32 %s13, %s20
    %p22 = scmp.eq.s32.totalorder %s21, 0
    %s24 = sadd.s32 %s23, 1
    %s25 = scalar_select %p22, %s23, %s24
    %p28 = pneg %p22
    %p29 = scmp.eq.s32.totalorder %s13, 1
    %p30 = por %p28, %p29
    %p31 = scmp.ne.s32.totalorder %s23, %s26
    %p32 = scmp.eq.s32.totalorder %s13, 0
    %p33 = por %p31, %p32
    %p34 = scmp.ne.s32.totalorder %s23, %s26
    %p35 = scmp.eq.s32.totalorder %s18, 1
    %p36 = por %p34, %p35
    %p37 = scmp.ne.s32.totalorder %s26, %s27
    %p38 = scmp.eq.s32.totalorder %s18, 0
    %p39 = por %p37, %p38
    %p40 = scmp.ne.s32.totalorder %s26, %s27
    %p41 = scmp.eq.s32.totalorder %s19, 1
    %p42 = por %p40, %p41
    %p44 = scmp.ne.s32.totalorder %s27, %s43
    %p45 = scmp.eq.s32.totalorder %s19, 0
    %p46 = por %p44, %p45
    %s48 = sadd.s32 %s47, 1
    %p51 = scmp.eq.s32.totalorder %s13, 1
    %p52 = scmp.ne.s32.totalorder %s47, %s49
    %p53 = scmp.eq.s32.totalorder %s13, 0
    %p54 = por %p52, %p53
    %p55 = scmp.ne.s32.totalorder %s47, %s49
    %p56 = scmp.eq.s32.totalorder %s18, 1
    %p57 = por %p55, %p56
    %p58 = scmp.ne.s32.totalorder %s49, %s50
    %p59 = scmp.eq.s32.totalorder %s18, 0
    %p60 = por %p58, %p59
    %p61 = scmp.ne.s32.totalorder %s49, %s50
    %p62 = scmp.eq.s32.totalorder %s19, 1
    %p63 = por %p61, %p62
    %p65 = scmp.ne.s32.totalorder %s50, %s64
    %p66 = scmp.eq.s32.totalorder %s19, 0
    %p67 = por %p65, %p66
    %s69 = sadd.s32 %s68, 1
    %p72 = scmp.eq.s32.totalorder %s13, 1
    %p73 = scmp.ne.s32.totalorder %s68, %s70
    %p74 = scmp.eq.s32.totalorder %s13, 0
    %p75 = por %p73, %p74
    %p76 = scmp.ne.s32.totalorder %s68, %s70
    %p77 = scmp.eq.s32.totalorder %s18, 1
    %p78 = por %p76, %p77
    %p79 = scmp.ne.s32.totalorder %s70, %s71
    %p80 = scmp.eq.s32.totalorder %s18, 0
    %p81 = por %p79, %p80
    %p82 = scmp.ne.s32.totalorder %s70, %s71
    %p83 = scmp.eq.s32.totalorder %s19, 1
    %p84 = por %p82, %p83
    %p86 = scmp.ne.s32.totalorder %s71, %s85
    %p87 = scmp.eq.s32.totalorder %s19, 0
    %p88 = por %p86, %p87
    %s90 = sadd.s32 %s89, 1
    %p93 = scmp.eq.s32.totalorder %s13, 1
    %p94 = scmp.ne.s32.totalorder %s89, %s91
    %p95 = scmp.eq.s32.totalorder %s13, 0
    %p96 = por %p94, %p95
    %p97 = scmp.ne.s32.totalorder %s89, %s91
    %p98 = scmp.eq.s32.totalorder %s18, 1
    %p99 = por %p97, %p98
    %p100 = scmp.ne.s32.totalorder %s91, %s92
    %p101 = scmp.eq.s32.totalorder %s18, 0
    %p102 = por %p100, %p101
    %p103 = scmp.ne.s32.totalorder %s91, %s92
    %p104 = scmp.eq.s32.totalorder %s19, 1
    %p105 = por %p103, %p104
    %p107 = scmp.ne.s32.totalorder %s92, %s106
    %p108 = scmp.eq.s32.totalorder %s19, 0
    %p109 = por %p107, %p108
    %s111 = sadd.s32 %s110, 1
    %p114 = scmp.eq.s32.totalorder %s13, 1
    %p115 = scmp.ne.s32.totalorder %s110, %s112
    %p116 = scmp.eq.s32.totalorder %s13, 0
    %p117 = por %p115, %p116
    %p118 = scmp.ne.s32.totalorder %s110, %s112
    %p119 = scmp.eq.s32.totalorder %s18, 1
    %p120 = por %p118, %p119
    %p121 = scmp.ne.s32.totalorder %s112, %s113
    %p122 = scmp.eq.s32.totalorder %s18, 0
    %p123 = por %p121, %p122
    %p124 = scmp.ne.s32.totalorder %s112, %s113
    %p125 = scmp.eq.s32.totalorder %s19, 1
    %p126 = por %p124, %p125
    %p128 = scmp.ne.s32.totalorder %s113, %s127
    %p129 = scmp.eq.s32.totalorder %s19, 0
    %p130 = por %p128, %p129
    %s131 = ssub.s32 %s13, %s20
    %p132 = scmp.eq.s32.totalorder %s131, 0
    %s134 = sadd.s32 %s133, 1
    %s135 = scalar_select %p132, %s133, %s134
    %p138 = pneg %p132
    %p139 = scmp.eq.s32.totalorder %s13, 1
    %p140 = por %p138, %p139
    %p141 = scmp.ne.s32.totalorder %s133, %s136
    %p142 = scmp.eq.s32.totalorder %s13, 0
    %p143 = por %p141, %p142
    %p144 = scmp.ne.s32.totalorder %s133, %s136
    %p145 = scmp.eq.s32.totalorder %s18, 1
    %p146 = por %p144, %p145
    %p147 = scmp.ne.s32.totalorder %s136, %s137
    %p148 = scmp.eq.s32.totalorder %s18, 0
    %p149 = por %p147, %p148
    %p150 = scmp.ne.s32.totalorder %s136, %s137
    %p151 = scmp.eq.s32.totalorder %s19, 1
    %p152 = por %p150, %p151
    %p154 = scmp.ne.s32.totalorder %s137, %s153
    %p155 = scmp.eq.s32.totalorder %s19, 0
    %p156 = por %p154, %p155
    %s157 = ssub.s32 %s13, %s20
    %p158 = scmp.eq.s32.totalorder %s157, 0
    %s160 = sadd.s32 %s159, 1
    %s161 = scalar_select %p158, %s159, %s160
    %p164 = pneg %p158
    %p165 = scmp.eq.s32.totalorder %s13, 1
    %p166 = por %p164, %p165
    %p167 = scmp.ne.s32.totalorder %s159, %s162
    %p168 = scmp.eq.s32.totalorder %s13, 0
    %p169 = por %p167, %p168
    %p170 = scmp.ne.s32.totalorder %s159, %s162
    %p171 = scmp.eq.s32.totalorder %s18, 1
    %p172 = por %p170, %p171
    %p173 = scmp.ne.s32.totalorder %s162, %s163
    %p174 = scmp.eq.s32.totalorder %s18, 0
    %p175 = por %p173, %p174
    %p176 = scmp.ne.s32.totalorder %s162, %s163
    %p177 = scmp.eq.s32.totalorder %s19, 1
    %p178 = por %p176, %p177
    %p180 = scmp.ne.s32.totalorder %s163, %s179
    %p181 = scmp.eq.s32.totalorder %s19, 0
    %p182 = por %p180, %p181
    %p183 = scmp.le.s32.totalorder 1, %s13
    %p184 = scmp.lt.s32.totalorder %s13, 3
    %p185 = pnand %p183, %p184
    %p186 = pneg %p185
    // Predicated region
    $region9: #{double_conv.4} parent=5 // pred_check
      _
    $region10: #{double_conv.4} parent=5 // pred_check_branch
      %188 = sbr.rel (%p185) target = $region12
    $region11: #{double_conv.4} parent=5 // pred_region
      %s189 = ssub.s32 %s13, 1
      // Predicated region
      $region13: #{double_conv.4} parent=11 // pred_check
        %p190 = pneg %p60
      $region14: #{double_conv.4} parent=11 // pred_check_branch
        %192 = sbr.rel (%p190) target = $region16
      $region15: #{double_conv.4} parent=11 // pred_region
        _
      $region16: #{double_conv.4} parent=11 // pred_fallthru
        _
      // Predicated region
      $region17: #{double_conv.4} parent=11 // pred_check
        %p193 = pneg %p81
      $region18: #{double_conv.4} parent=11 // pred_check_branch
        %195 = sbr.rel (%p193) target = $region20
      $region19: #{double_conv.4} parent=11 // pred_region
        _
      $region20: #{double_conv.4} parent=11 // pred_fallthru
        _
      // Predicated region
      $region21: #{double_conv.4} parent=11 // pred_check
        %p196 = pneg %p102
      $region22: #{double_conv.4} parent=11 // pred_check_branch
        %198 = sbr.rel (%p196) target = $region24
      $region23: #{double_conv.4} parent=11 // pred_region
        _
      $region24: #{double_conv.4} parent=11 // pred_fallthru
        _
      // Predicated region
      $region25: #{double_conv.4} parent=11 // pred_check
        %p199 = pneg %p123
      $region26: #{double_conv.4} parent=11 // pred_check_branch
        %201 = sbr.rel (%p199) target = $region28
      $region27: #{double_conv.4} parent=11 // pred_region
        _
      $region28: #{double_conv.4} parent=11 // pred_fallthru
        _
    $region12: #{double_conv.4} parent=5 // pred_fallthru
      _
    %p202 = scmp.lt.s32.totalorder %s13, 2
    // Predicated region
    $region29: #{double_conv.4} parent=5 // pred_check
      %p203 = pneg %p202
    $region30: #{double_conv.4} parent=5 // pred_check_branch
      %205 = sbr.rel (%p203) target = $region32
    $region31: #{double_conv.4} parent=5 // pred_region
      // Predicated region
      $region33: #{double_conv.4} parent=31 // pred_check
        %p206 = pneg %p33
      $region34: #{double_conv.4} parent=31 // pred_check_branch
        %208 = sbr.rel (%p206) target = $region36
      $region35: #{double_conv.4} parent=31 // pred_region
        %p209 = scmp.lt.s32.totalorder %s13, 1
        %s210 = scalar_select %p209, %s13, 1
        %s211 = smul.addr %s210, 2
        %s212 = smul.addr %s211, 8
        %s213 = scalar_lea.vmem %s0, %s212
      $region36: #{double_conv.4} parent=31 // pred_fallthru
        _
    $region32: #{double_conv.4} parent=5 // pred_fallthru
      _
    %p214 = scmp.le.s32.totalorder 1, %s13
    %p215 = scmp.lt.s32.totalorder %s13, 3
    %p216 = pnand %p214, %p215
    %p217 = pneg %p216
    // Predicated region
    $region37: #{double_conv.4} parent=5 // pred_check
      _
    $region38: #{double_conv.4} parent=5 // pred_check_branch
      %219 = sbr.rel (%p216) target = $region40
    $region39: #{double_conv.4} parent=5 // pred_region
      %s220 = ssub.s32 %s13, 1
      %p221 = scmp.lt.s32.totalorder %s18, 1
      %s222 = scalar_select %p221, %s18, 1
      %s223 = smul.addr %s222, 2
      %s224 = smul.addr %s223, 8
      %s225 = scalar_lea.vmem %s0, %s224
      %p226 = pneg %p39
      %p227 = pneg %p36
      %p228 = pneg %p60
      %p229 = pneg %p57
      %p230 = pneg %p81
      %p231 = pneg %p78
      %p232 = pneg %p102
      %p233 = pneg %p99
      %p234 = pneg %p123
      %p235 = pneg %p120
      %p236 = pneg %p149
      %p237 = pneg %p146
      %p238 = scmp.lt.s32.totalorder %s18, 1
      %s239 = scalar_select %p238, %s18, 1
      %s240 = smul.addr %s239, 2
      %s241 = smul.addr %s240, 8
      %s242 = scalar_lea.vmem %s5, %s241
      %p243 = pneg %p175
      %p244 = pneg %p172
      %p245 = scmp.lt.s32.totalorder %s18, 1
      %s246 = scalar_select %p245, %s18, 1
      %s247 = smul.addr %s246, 8
      %s248 = scalar_lea.vmem %s6, %s247
      %p249 = scmp.lt.s32.totalorder %s18, 1
      %s250 = scalar_select %p249, %s18, 1
      %s251 = smul.addr %s250, 2
      %s252 = smul.addr %s251, 8
      %s253 = scalar_lea.vmem %s0, %s252
      %p254 = scmp.lt.s32.totalorder %s18, 1
      %s255 = scalar_select %p254, %s18, 1
      %s256 = smul.addr %s255, 2
      %s257 = smul.addr %s256, 8
      %s258 = scalar_lea.vmem %s5, %s257
      %p259 = scmp.lt.s32.totalorder %s18, 1
      %s260 = scalar_select %p259, %s18, 1
      %s261 = smul.addr %s260, 8
      %s262 = scalar_lea.vmem %s6, %s261
      %v263 = vld [vmem:[%s253] sm:$0xff]
      %v264 = vld [vmem:[%s253 + $0x8] sm:$0xff]
      %v265 = vld [vmem:[%s1] sm:$0xff]
      %267 = vset.pattern.permute.xlu0 0
      %268 = vperm.xlu0 %267, %v265
      %v269 = vpop.permute.xlu0 %268
      %v271 = vmul.f32 %v263, %v269
      %v272 = vmul.f32 %v264, %v269
      %v273 = vld [vmem:[%s2] sm:$0xff]
      %275 = vset.pattern.permute.xlu0 0
      %276 = vperm.xlu0 %275, %v273
      %v277 = vpop.permute.xlu0 %276
      %v279 = vadd.f32 %v271, %v277
      %v280 = vadd.f32 %v272, %v277
      %v281 = vmax.f32 %v279, 0.0
      %v282 = vmax.f32 %v280, 0.0
      %vm283 = vcmask 138240
      %284 = vst.msk [vmem:[#allocation2] sm:$0xff] %vm283, 0.0
      %vm285 = vcmask 277640
      %286 = vst.msk [vmem:[#allocation2 + $0x10] sm:$0xff] %vm285, 0.0
      %289 = vrot.lane.b32.xlu0 %v281, 17
      %v290 = vpop.permute.xlu0 %289
      %291 = vrot.lane.b32.xlu0 %v282, 17
      %v292 = vpop.permute.xlu0 %291
      %v293 = vsel %vm283, %v290, %v292
      %vm297 = vcmask 1047688
      %298 = vst.msk [vmem:[#allocation2] sm:$0xff] %vm297, %v290
      %299 = vst [vmem:[#allocation2 + $0x8] sm:$0xff] %v293
      %300 = vst.msk [vmem:[#allocation2 + $0x10] sm:$0xff] %vm283, %v292
      %v301 = vlaneseq
      %v302 = vand.u32 %v301, 127
      %v303 = vadd.s32 %v302, 128
      %vm304 = vcmp.lt.s32.totalorder %v302, 0
      %v305 = vsub.s32 0, %v302
      %v306 = vsel %vm304, %v305, %v302
      %v307 = vshrl.u32 %v306, 4
      %v308 = vand.u32 %v306, 15
      %v309 = vsub.s32 0, %v308
      %v310 = vsel %vm304, %v309, %v308
      %vm311 = vcmp.lt.s32.totalorder %v303, 0
      %v312 = vsub.s32 0, %v303
      %v313 = vsel %vm311, %v312, %v303
      %v314 = vshrl.u32 %v313, 4
      %v315 = vand.u32 %v313, 15
      %v316 = vsub.s32 0, %v315
      %v317 = vsel %vm311, %v316, %v315
      %vm318 = vcmp.ne.s32.totalorder %v310, 0
      %vm319 = vcmp.ne.s32.totalorder %v317, 0
      %vm320 = vcmp.lt.s32.totalorder %v310, 0
      %vm321 = vcmp.lt.s32.totalorder %v317, 0
      %vm322 = vmand %vm320, %vm318
      %vm323 = vmand %vm321, %vm319
      %v324 = vadd.s32 %v310, 16
      %v325 = vadd.s32 %v317, 16
      %v326 = vsel %vm322, %v324, %v310
      %v327 = vsel %vm323, %v325, %v317
      %vm328 = vcmp.ge.s32.totalorder %v326, 1
      %vm329 = vcmp.ge.s32.totalorder %v327, 1
      %v330 = vsel %vm328, 1, 0
      %v331 = vsel %vm329, 1, 0
      %v332 = vcvt.s32.f32 %v330
      %v333 = vcvt.s32.f32 %v331
      %vm334 = vcmp.le.s32.totalorder %v326, 14
      %vm335 = vcmp.le.s32.totalorder %v327, 14
      %v336 = vsel %vm334, 1, 0
      %v337 = vsel %vm335, 1, 0
      %v338 = vcvt.s32.f32 %v336
      %v339 = vcvt.s32.f32 %v337
      %v340 = vld [vmem:[#allocation2] sm:$0xff]
      %v341 = vld [vmem:[#allocation2 + $0x8] sm:$0xff]
      %v342 = vmul.f32 %v340, %v332
      %v343 = vmul.f32 %v341, %v333
      %344 = vst [vmem:[#allocation3] sm:$0xff] %v342
      %345 = vst [vmem:[#allocation3 + $0x8] sm:$0xff] %v343
      %v346 = vld [vmem:[#allocation2] sm:$0xff]
      %v347 = vld [vmem:[#allocation2 + $0x8] sm:$0xff]
      %v348 = vld [vmem:[#allocation2 + $0x10] sm:$0xff]
      %352 = vrot.lane.b32.xlu0 %v346, 127
      %v353 = vpop.permute.xlu0 %352
      %354 = vrot.lane.b32.xlu0 %v347, 127
      %v355 = vpop.permute.xlu0 %354
      %356 = vrot.lane.b32.xlu0 %v348, 127
      %v357 = vpop.permute.xlu0 %356
      %vm358 = vcmask 1039360
      %v359 = vsel %vm358, %v353, %v355
      %v360 = vsel %vm358, %v355, %v357
      %363 = vst [vmem:[#allocation3 + $0x10] sm:$0xff] %v359
      %364 = vst [vmem:[#allocation3 + $0x18] sm:$0xff] %v360
      %v365 = vld [vmem:[#allocation2] sm:$0xff]
      %v366 = vld [vmem:[#allocation2 + $0x8] sm:$0xff]
      %v367 = vld [vmem:[#allocation2 + $0x10] sm:$0xff]
      %370 = vrot.lane.b32.xlu0 %v338, 2
      %v371 = vpop.permute.xlu0 %370
      %372 = vrot.lane.b32.xlu0 %v339, 2
      %v373 = vpop.permute.xlu0 %372
      %vm374 = vcmask 15360
      %v375 = vsel %vm374, %v371, %v373
      %v379 = vmul.f32 %v365, %v371
      %v380 = vmul.f32 %v366, %v375
      %v381 = vmul.f32 %v367, %v373
      %385 = vrot.lane.b32.xlu0 %v379, 126
      %v386 = vpop.permute.xlu0 %385
      %387 = vrot.lane.b32.xlu0 %v380, 126
      %v388 = vpop.permute.xlu0 %387
      %389 = vrot.lane.b32.xlu0 %v381, 126
      %v390 = vpop.permute.xlu0 %389
      %vm391 = vcmask 1031168
      %v392 = vsel %vm391, %v386, %v388
      %v393 = vsel %vm391, %v388, %v390
      %396 = vst [vmem:[#allocation3 + $0x20] sm:$0xff] %v392
      %397 = vst [vmem:[#allocation3 + $0x28] sm:$0xff] %v393
      %v398 = vld [vmem:[#allocation2] sm:$0xff]
      %v399 = vld [vmem:[#allocation2 + $0x8] sm:$0xff]
      %v400 = vld [vmem:[#allocation2 + $0x10] sm:$0xff]
      %403 = vrot.lane.b32.xlu0 %v332, 16
      %v404 = vpop.permute.xlu0 %403
      %405 = vrot.lane.b32.xlu0 %v333, 16
      %v406 = vpop.permute.xlu0 %405
      %vm407 = vcmask 130048
      %v408 = vsel %vm407, %v404, %v406
      %v412 = vmul.f32 %v398, %v404
      %v413 = vmul.f32 %v399, %v408
      %v414 = vmul.f32 %v400, %v406
      %418 = vrot.lane.b32.xlu0 %v412, 112
      %v419 = vpop.permute.xlu0 %418
      %420 = vrot.lane.b32.xlu0 %v413, 112
      %v421 = vpop.permute.xlu0 %420
      %422 = vrot.lane.b32.xlu0 %v414, 112
      %v423 = vpop.permute.xlu0 %422
      %vm424 = vcmask 916480
      %v425 = vsel %vm424, %v419, %v421
      %v426 = vsel %vm424, %v421, %v423
      %429 = vst [vmem:[#allocation3 + $0x30] sm:$0xff] %v425
      %430 = vst [vmem:[#allocation3 + $0x38] sm:$0xff] %v426
      %v431 = vld [vmem:[#allocation2] sm:$0xff]
      %v432 = vld [vmem:[#allocation2 + $0x8] sm:$0xff]
      %v433 = vld [vmem:[#allocation2 + $0x10] sm:$0xff]
      %437 = vrot.lane.b32.xlu0 %v431, 111
      %v438 = vpop.permute.xlu0 %437
      %439 = vrot.lane.b32.xlu0 %v432, 111
      %v440 = vpop.permute.xlu0 %439
      %441 = vrot.lane.b32.xlu0 %v433, 111
      %v442 = vpop.permute.xlu0 %441
      %vm443 = vcmask 908288
      %v444 = vsel %vm443, %v438, %v440
      %v445 = vsel %vm443, %v440, %v442
      %448 = vst [vmem:[#allocation3 + $0x40] sm:$0xff] %v444
      %449 = vst [vmem:[#allocation3 + $0x48] sm:$0xff] %v445
      %v450 = vld [vmem:[#allocation2] sm:$0xff]
      %v451 = vld [vmem:[#allocation2 + $0x8] sm:$0xff]
      %v452 = vld [vmem:[#allocation2 + $0x10] sm:$0xff]
      %453 = vrot.lane.b32.xlu0 %v338, 18
      %v454 = vpop.permute.xlu0 %453
      %455 = vrot.lane.b32.xlu0 %v339, 18
      %v456 = vpop.permute.xlu0 %455
      %vm457 = vcmask 146432
      %v458 = vsel %vm457, %v454, %v456
      %v462 = vmul.f32 %v450, %v454
      %v463 = vmul.f32 %v451, %v458
      %v464 = vmul.f32 %v452, %v456
      %468 = vrot.lane.b32.xlu0 %v462, 110
      %v469 = vpop.permute.xlu0 %468
      %470 = vrot.lane.b32.xlu0 %v463, 110
      %v471 = vpop.permute.xlu0 %470
      %472 = vrot.lane.b32.xlu0 %v464, 110
      %v473 = vpop.permute.xlu0 %472
      %vm474 = vcmask 900096
      %v475 = vsel %vm474, %v469, %v471
      %v476 = vsel %vm474, %v471, %v473
      %479 = vst [vmem:[#allocation3 + $0x50] sm:$0xff] %v475
      %480 = vst [vmem:[#allocation3 + $0x58] sm:$0xff] %v476
      %v481 = vld [vmem:[#allocation2] sm:$0xff]
      %v482 = vld [vmem:[#allocation2 + $0x8] sm:$0xff]
      %v483 = vld [vmem:[#allocation2 + $0x10] sm:$0xff]
      %484 = vrot.lane.b32.xlu0 %v332, 32
      %v485 = vpop.permute.xlu0 %484
      %486 = vrot.lane.b32.xlu0 %v333, 32
      %v487 = vpop.permute.xlu0 %486
      %vm488 = vcmask 261120
      %v489 = vsel %vm488, %v485, %v487
      %v493 = vmul.f32 %v481, %v485
      %v494 = vmul.f32 %v482, %v489
      %v495 = vmul.f32 %v483, %v487
      %499 = vrot.lane.b32.xlu0 %v493, 96
      %v500 = vpop.permute.xlu0 %499
      %501 = vrot.lane.b32.xlu0 %v494, 96
      %v502 = vpop.permute.xlu0 %501
      %503 = vrot.lane.b32.xlu0 %v495, 96
      %v504 = vpop.permute.xlu0 %503
      %vm505 = vcmask 785408
      %v506 = vsel %vm505, %v500, %v502
      %v507 = vsel %vm505, %v502, %v504
      %510 = vst [vmem:[#allocation3 + $0x60] sm:$0xff] %v506
      %511 = vst [vmem:[#allocation3 + $0x68] sm:$0xff] %v507
      %v512 = vld [vmem:[#allocation2] sm:$0xff]
      %v513 = vld [vmem:[#allocation2 + $0x8] sm:$0xff]
      %v514 = vld [vmem:[#allocation2 + $0x10] sm:$0xff]
      %518 = vrot.lane.b32.xlu0 %v512, 95
      %v519 = vpop.permute.xlu0 %518
      %520 = vrot.lane.b32.xlu0 %v513, 95
      %v521 = vpop.permute.xlu0 %520
      %522 = vrot.lane.b32.xlu0 %v514, 95
      %v523 = vpop.permute.xlu0 %522
      %vm524 = vcmask 777216
      %v525 = vsel %vm524, %v519, %v521
      %v526 = vsel %vm524, %v521, %v523
      %529 = vst [vmem:[#allocation3 + $0x70] sm:$0xff] %v525
      %530 = vst [vmem:[#allocation3 + $0x78] sm:$0xff] %v526
      %v531 = vld [vmem:[#allocation2] sm:$0xff]
      %v532 = vld [vmem:[#allocation2 + $0x8] sm:$0xff]
      %v533 = vld [vmem:[#allocation2 + $0x10] sm:$0xff]
      %534 = vrot.lane.b32.xlu0 %v338, 34
      %v535 = vpop.permute.xlu0 %534
      %536 = vrot.lane.b32.xlu0 %v339, 34
      %v537 = vpop.permute.xlu0 %536
      %vm538 = vcmask 277504
      %v539 = vsel %vm538, %v535, %v537
      %v543 = vmul.f32 %v531, %v535
      %v544 = vmul.f32 %v532, %v539
      %v545 = vmul.f32 %v533, %v537
      %549 = vrot.lane.b32.xlu0 %v543, 94
      %v550 = vpop.permute.xlu0 %549
      %551 = vrot.lane.b32.xlu0 %v544, 94
      %v552 = vpop.permute.xlu0 %551
      %553 = vrot.lane.b32.xlu0 %v545, 94
      %v554 = vpop.permute.xlu0 %553
      %vm555 = vcmask 769024
      %v556 = vsel %vm555, %v550, %v552
      %v557 = vsel %vm555, %v552, %v554
      %560 = vst [vmem:[#allocation3 + $0x80] sm:$0xff] %v556
      %561 = vst [vmem:[#allocation3 + $0x88] sm:$0xff] %v557
      %v562 = vld [vmem:[%s3] sm:$0xff]
      %v563 = vld [vmem:[#allocation3] sm:$0xff]
      %v564 = vld [vmem:[#allocation3 + $0x8] sm:$0xff]
      %v565 = vld [vmem:[#allocation3 + $0x10] sm:$0xff]
      %v566 = vld [vmem:[#allocation3 + $0x18] sm:$0xff]
      %v567 = vld [vmem:[#allocation3 + $0x20] sm:$0xff]
      %v568 = vld [vmem:[#allocation3 + $0x28] sm:$0xff]
      %v569 = vld [vmem:[#allocation3 + $0x30] sm:$0xff]
      %v570 = vld [vmem:[#allocation3 + $0x38] sm:$0xff]
      %v571 = vld [vmem:[#allocation3 + $0x40] sm:$0xff]
      %v572 = vld [vmem:[#allocation3 + $0x48] sm:$0xff]
      %v573 = vld [vmem:[#allocation3 + $0x50] sm:$0xff]
      %v574 = vld [vmem:[#allocation3 + $0x58] sm:$0xff]
      %v575 = vld [vmem:[#allocation3 + $0x60] sm:$0xff]
      %v576 = vld [vmem:[#allocation3 + $0x68] sm:$0xff]
      %v577 = vld [vmem:[#allocation3 + $0x70] sm:$0xff]
      %v578 = vld [vmem:[#allocation3 + $0x78] sm:$0xff]
      %v579 = vld [vmem:[#allocation3 + $0x80] sm:$0xff]
      %v580 = vld [vmem:[#allocation3 + $0x88] sm:$0xff]
      %v581 = vld [vmem:[%s4] sm:$0xff]
      %583 = vset.pattern.permute.xlu0 0
      %584 = vperm.xlu0 %583, %v581
      %v585 = vpop.permute.xlu0 %584
      %vm587 = vcmask 588800
      %v589 = vsel %vm587, %v562, 0
      %591 = vmatprep.subr.mxu0 %v564
      %592 = vmatpush1.msra.mxu0 %v563
      %593 = vmatprep.subr.mxu0 %v566
      %594 = vmatpush1.msra.mxu0 %v565
      %595 = vmatprep.subr.mxu0 %v568
      %596 = vmatpush1.msra.mxu0 %v567
      %597 = vmatprep.subr.mxu0 %v570
      %598 = vmatpush1.msra.mxu0 %v569
      %599 = vmatprep.subr.mxu0 %v572
      %600 = vmatpush1.msra.mxu0 %v571
      %601 = vmatprep.subr.mxu0 %v574
      %602 = vmatpush1.msra.mxu0 %v573
      %603 = vmatprep.subr.mxu0 %v576
      %604 = vmatpush1.msra.mxu0 %v575
      %605 = vmatprep.subr.mxu0 %v578
      %606 = vmatpush1.msra.mxu0 %v577
      %607 = vmatprep.subr.mxu0 %v580
      %608 = vmatpush1.msra.mxu0 %v579
      %609 = vmatprep.subr.mxu0 0.0
      %610 = vmatpush1.msra.mxu0 0.0
      %611 = vmatprep.subr.mxu0 0.0
      %612 = vmatpush1.msra.mxu0 0.0
      %613 = vmatprep.subr.mxu0 0.0
      %614 = vmatpush1.msra.mxu0 0.0
      %615 = vmatprep.subr.mxu0 0.0
      %616 = vmatpush1.msra.mxu0 0.0
      %617 = vmatprep.subr.mxu0 0.0
      %618 = vmatpush1.msra.mxu0 0.0
      %619 = vmatprep.subr.mxu0 0.0
      %620 = vmatpush1.msra.mxu0 0.0
      %621 = vmatprep.subr.mxu0 0.0
      %622 = vmatpush1.msra.mxu0 0.0
      %623 = vmatprep.subr.mxu0 0.0
      %624 = vmatpush1.msra.mxu0 0.0
      %625 = vmatprep.subr.mxu0 0.0
      %626 = vmatpush1.msra.mxu0 0.0
      %627 = vmatprep.subr.mxu0 0.0
      %628 = vmatpush1.msra.mxu0 0.0
      %629 = vmatprep.subr.mxu0 0.0
      %630 = vmatpush1.msra.mxu0 0.0
      %631 = vmatprep.subr.mxu0 0.0
      %632 = vmatpush1.msra.mxu0 0.0
      %633 = vmatprep.subr.mxu0 0.0
      %634 = vmatpush1.msra.mxu0 0.0
      %635 = vmatprep.subr.mxu0 0.0
      %636 = vmatpush1.msra.mxu0 0.0
      %637 = vmatprep.subr.mxu0 0.0
      %638 = vmatpush1.msra.mxu0 0.0
      %639 = vmatprep.subr.mxu0 0.0
      %640 = vmatpush1.msra.mxu0 0.0
      %641 = vmatprep.subr.mxu0 0.0
      %642 = vmatpush1.msra.mxu0 0.0
      %643 = vmatprep.subr.mxu0 0.0
      %644 = vmatpush1.msra.mxu0 0.0
      %645 = vmatprep.subr.mxu0 0.0
      %646 = vmatpush1.msra.mxu0 0.0
      %647 = vmatprep.subr.mxu0 0.0
      %648 = vmatpush1.msra.mxu0 0.0
      %649 = vmatprep.subr.mxu0 0.0
      %650 = vmatpush1.msra.mxu0 0.0
      %651 = vmatprep.subr.mxu0 0.0
      %652 = vmatpush1.msra.mxu0 0.0
      %653 = vmatprep.subr.mxu0 0.0
      %654 = vmatpush1.msra.mxu0 0.0
      %655 = vmatprep.mubr.f32.mxu0 0.0
      %656 = vmatmul.mubr.f32.gmra.mrb[0].mxu0 %v589
      %v657 = vpop.f32.mrb[0].mxu0
      %v658 = vadd.f32 %v585, %v657
      %v659 = vpop.f32.mrb[0].mxu0
      %v660 = vadd.f32 %v585, %v659
      %661 = vdwg.mxu0
      %662 = vst [vmem:[%s258] sm:$0xff] %v658
      %663 = vst [vmem:[%s258 + $0x8] sm:$0xff] %v660
      %v664 = vadd.f32 %v658, %v660
      %665 = vadd.xlane.f32.xlu0 %v664
      %v666 = vpop.xlane.xlu0 %665
      %vm667 = vcmask 7168
      %668 = vst.msk [vmem:[%s262] sm:$0xff] %vm667, %v666
      %v669 = vmul.f32 %v658, %v658
      %v670 = vmul.f32 %v660, %v660
      %v671 = vadd.f32 %v669, %v670
      %672 = vadd.xlane.f32.xlu0 %v671
      %v673 = vpop.xlane.xlu0 %672
      %vm674 = vcmask 15368
      %675 = vst.msk [vmem:[%s262] sm:$0xff] %vm674, %v673
      %p676 = scmp.lt.s32.totalorder %s18, 1
      %s677 = scalar_select %p676, %s18, 1
      %s678 = smul.addr %s677, 2
      %s679 = smul.addr %s678, 8
      %s680 = scalar_lea.vmem %s5, %s679
      %p681 = scmp.lt.s32.totalorder %s18, 1
      %s682 = scalar_select %p681, %s18, 1
      %s683 = smul.addr %s682, 8
      %s684 = scalar_lea.vmem %s6, %s683
      // Predicated region
      $region41: #{double_conv.4} parent=39 // pred_check
        %p685 = pneg %p146
      $region42: #{double_conv.4} parent=39 // pred_check_branch
        %687 = sbr.rel (%p685) target = $region44
      $region43: #{double_conv.4} parent=39 // pred_region
        _
      $region44: #{double_conv.4} parent=39 // pred_fallthru
        _
      // Predicated region
      $region45: #{double_conv.4} parent=39 // pred_check
        %p688 = pneg %p172
      $region46: #{double_conv.4} parent=39 // pred_check_branch
        %690 = sbr.rel (%p688) target = $region48
      $region47: #{double_conv.4} parent=39 // pred_region
        _
      $region48: #{double_conv.4} parent=39 // pred_fallthru
        _
    $region40: #{double_conv.4} parent=5 // pred_fallthru
      _
    %p691 = scmp.le.s32.totalorder 2, %s13
    // Predicated region
    $region49: #{double_conv.4} parent=5 // pred_check
      %p692 = pneg %p691
    $region50: #{double_conv.4} parent=5 // pred_check_branch
      %694 = sbr.rel (%p692) target = $region52
    $region51: #{double_conv.4} parent=5 // pred_region
      %s695 = ssub.s32 %s13, 2
      // Predicated region
      $region53: #{double_conv.4} parent=51 // pred_check
        %p696 = pneg %p152
      $region54: #{double_conv.4} parent=51 // pred_check_branch
        %698 = sbr.rel (%p696) target = $region56
      $region55: #{double_conv.4} parent=51 // pred_region
        %p699 = scmp.lt.s32.totalorder %s19, 1
        %s700 = scalar_select %p699, %s19, 1
        %s701 = smul.addr %s700, 2
        %s702 = smul.addr %s701, 8
        %s703 = scalar_lea.vmem %s5, %s702
      $region56: #{double_conv.4} parent=51 // pred_fallthru
        _
      // Predicated region
      $region57: #{double_conv.4} parent=51 // pred_check
        %p704 = pneg %p178
      $region58: #{double_conv.4} parent=51 // pred_check_branch
        %706 = sbr.rel (%p704) target = $region60
      $region59: #{double_conv.4} parent=51 // pred_region
        %p707 = scmp.lt.s32.totalorder %s19, 1
        %s708 = scalar_select %p707, %s19, 1
        %s709 = smul.addr %s708, 8
        %s710 = scalar_lea.vmem %s6, %s709
      $region60: #{double_conv.4} parent=51 // pred_fallthru
        _
    $region52: #{double_conv.4} parent=5 // pred_fallthru
      _
  $region6: #{double_conv.4} parent=0 // loop_footer
    %s17 = sadd.s32 1, %s13
  $region7: #{double_conv.4} parent=0 // loop_footer_branch
    %12 = sbr.rel target = $region3
  $region8: #{double_conv.4} parent=0 // loop_exit
    _

// kernel: double_conv.3
$region0: #{double_conv.3}
  #allocation0 [shape = 'u32[]', space=smem, size = 0x4, offset = 0x4, fixed_abs, tag = 'smem constant byte address 0x4 - core index']
  #allocation1 [shape = 'u32[144,128]{1,0:T(1,128)}', space=vmem, size = 0x12000, scoped, tag = 'internal scratch']
  #allocation2 [shape = 'f32[4,290]{1,0:T(4,128)}', space=vmem, size = 0x1800, scoped, tag = 'scratch operand']
  #allocation3 [shape = 'f32[36,256]{1,0:T(8,128)}', space=vmem, size = 0xa000, scoped, tag = 'scratch operand']
  %s0 = inlined_call_operand.vmem [shape: f32[2,4,256], index: 0, kind: input, shape index: {}]
  %s1 = inlined_call_operand.vmem [shape: f32[8,36], index: 1, kind: input, shape index: {}]
  %s2 = inlined_call_operand.vmem [shape: f32[8,1], index: 2, kind: input, shape index: {}]
  %s3 = inlined_call_operand.vmem [shape: f32[2,8,256], index: 3, kind: output, shape index: {0}]
  %s4 = inlined_call_operand.vmem [shape: f32[2,8,2], index: 4, kind: output, shape index: {1}]
  %5 = xla_tuple %s3, %s4
  %s6 = sld [smem:[#allocation0]]
  $region53: #{double_conv.3} parent=0
    _
  %s8 = ssub.s32 1, %s6
  %s9 = scalar_select 0, %s8, %s6
  loop: start=0, step=1, limit=4
  $region2: #{double_conv.3} parent=0 // loop_pre_header
    _
  $region3: #{double_conv.3} parent=0 // loop_header
    %s11 = sphi 0, %s15
    %p12 = scmp.ge.s32.totalorder %s11, 4
    %s21 = sphi 0, %s23
    %s24 = sphi 0, %s21
    %s25 = sphi 0, %s24
    %s41 = sphi 0, %s25
    %s45 = sphi 0, %s45
    %s47 = sphi 0, %s45
    %s48 = sphi 0, %s47
    %s62 = sphi 0, %s48
    %s66 = sphi 0, %s66
    %s68 = sphi 0, %s66
    %s69 = sphi 0, %s68
    %s83 = sphi 0, %s69
    %s89 = sphi 0, %s91
    %s92 = sphi 0, %s89
    %s93 = sphi 0, %s92
    %s109 = sphi 0, %s93
    %s115 = sphi 0, %s117
    %s118 = sphi 0, %s115
    %s119 = sphi 0, %s118
    %s135 = sphi 0, %s119
  $region4: #{double_conv.3} parent=0 // loop_header_branch
    %14 = sbr.rel (%p12) target = $region8
  $region5: #{double_conv.3} parent=0 // loop_body
    %s16 = ssub.s32 %s11, 1
    %s17 = ssub.s32 %s11, 2
    %s18 = sadd.s32 %s11, 1
    %s19 = ssub.s32 %s11, %s18
    %p20 = scmp.eq.s32.totalorder %s19, 0
    %s22 = sadd.s32 %s21, 1
    %s23 = scalar_select %p20, %s21, %s22
    %p26 = pneg %p20
    %p27 = scmp.eq.s32.totalorder %s11, 1
    %p28 = por %p26, %p27
    %p29 = scmp.ne.s32.totalorder %s21, %s24
    %p30 = scmp.eq.s32.totalorder %s11, 0
    %p31 = por %p29, %p30
    %p32 = scmp.ne.s32.totalorder %s21, %s24
    %p33 = scmp.eq.s32.totalorder %s16, 1
    %p34 = por %p32, %p33
    %p35 = scmp.ne.s32.totalorder %s24, %s25
    %p36 = scmp.eq.s32.totalorder %s16, 0
    %p37 = por %p35, %p36
    %p38 = scmp.ne.s32.totalorder %s24, %s25
    %p39 = scmp.eq.s32.totalorder %s17, 1
    %p40 = por %p38, %p39
    %p42 = scmp.ne.s32.totalorder %s25, %s41
    %p43 = scmp.eq.s32.totalorder %s17, 0
    %p44 = por %p42, %p43
    %s46 = sadd.s32 %s45, 1
    %p49 = scmp.eq.s32.totalorder %s11, 1
    %p50 = scmp.ne.s32.totalorder %s45, %s47
    %p51 = scmp.eq.s32.totalorder %s11, 0
    %p52 = por %p50, %p51
    %p53 = scmp.ne.s32.totalorder %s45, %s47
    %p54 = scmp.eq.s32.totalorder %s16, 1
    %p55 = por %p53, %p54
    %p56 = scmp.ne.s32.totalorder %s47, %s48
    %p57 = scmp.eq.s32.totalorder %s16, 0
    %p58 = por %p56, %p57
    %p59 = scmp.ne.s32.totalorder %s47, %s48
    %p60 = scmp.eq.s32.totalorder %s17, 1
    %p61 = por %p59, %p60
    %p63 = scmp.ne.s32.totalorder %s48, %s62
    %p64 = scmp.eq.s32.totalorder %s17, 0
    %p65 = por %p63, %p64
    %s67 = sadd.s32 %s66, 1
    %p70 = scmp.eq.s32.totalorder %s11, 1
    %p71 = scmp.ne.s32.totalorder %s66, %s68
    %p72 = scmp.eq.s32.totalorder %s11, 0
    %p73 = por %p71, %p72
    %p74 = scmp.ne.s32.totalorder %s66, %s68
    %p75 = scmp.eq.s32.totalorder %s16, 1
    %p76 = por %p74, %p75
    %p77 = scmp.ne.s32.totalorder %s68, %s69
    %p78 = scmp.eq.s32.totalorder %s16, 0
    %p79 = por %p77, %p78
    %p80 = scmp.ne.s32.totalorder %s68, %s69
    %p81 = scmp.eq.s32.totalorder %s17, 1
    %p82 = por %p80, %p81
    %p84 = scmp.ne.s32.totalorder %s69, %s83
    %p85 = scmp.eq.s32.totalorder %s17, 0
    %p86 = por %p84, %p85
    %s87 = ssub.s32 %s11, %s18
    %p88 = scmp.eq.s32.totalorder %s87, 0
    %s90 = sadd.s32 %s89, 1
    %s91 = scalar_select %p88, %s89, %s90
    %p94 = pneg %p88
    %p95 = scmp.eq.s32.totalorder %s11, 1
    %p96 = por %p94, %p95
    %p97 = scmp.ne.s32.totalorder %s89, %s92
    %p98 = scmp.eq.s32.totalorder %s11, 0
    %p99 = por %p97, %p98
    %p100 = scmp.ne.s32.totalorder %s89, %s92
    %p101 = scmp.eq.s32.totalorder %s16, 1
    %p102 = por %p100, %p101
    %p103 = scmp.ne.s32.totalorder %s92, %s93
    %p104 = scmp.eq.s32.totalorder %s16, 0
    %p105 = por %p103, %p104
    %p106 = scmp.ne.s32.totalorder %s92, %s93
    %p107 = scmp.eq.s32.totalorder %s17, 1
    %p108 = por %p106, %p107
    %p110 = scmp.ne.s32.totalorder %s93, %s109
    %p111 = scmp.eq.s32.totalorder %s17, 0
    %p112 = por %p110, %p111
    %s113 = ssub.s32 %s11, %s18
    %p114 = scmp.eq.s32.totalorder %s113, 0
    %s116 = sadd.s32 %s115, 1
    %s117 = scalar_select %p114, %s115, %s116
    %p120 = pneg %p114
    %p121 = scmp.eq.s32.totalorder %s11, 1
    %p122 = por %p120, %p121
    %p123 = scmp.ne.s32.totalorder %s115, %s118
    %p124 = scmp.eq.s32.totalorder %s11, 0
    %p125 = por %p123, %p124
    %p126 = scmp.ne.s32.totalorder %s115, %s118
    %p127 = scmp.eq.s32.totalorder %s16, 1
    %p128 = por %p126, %p127
    %p129 = scmp.ne.s32.totalorder %s118, %s119
    %p130 = scmp.eq.s32.totalorder %s16, 0
    %p131 = por %p129, %p130
    %p132 = scmp.ne.s32.totalorder %s118, %s119
    %p133 = scmp.eq.s32.totalorder %s17, 1
    %p134 = por %p132, %p133
    %p136 = scmp.ne.s32.totalorder %s119, %s135
    %p137 = scmp.eq.s32.totalorder %s17, 0
    %p138 = por %p136, %p137
    %p139 = scmp.le.s32.totalorder 1, %s11
    %p140 = scmp.lt.s32.totalorder %s11, 3
    %p141 = pnand %p139, %p140
    %p142 = pneg %p141
    // Predicated region
    $region9: #{double_conv.3} parent=5 // pred_check
      _
    $region10: #{double_conv.3} parent=5 // pred_check_branch
      %144 = sbr.rel (%p141) target = $region12
    $region11: #{double_conv.3} parent=5 // pred_region
      %s145 = ssub.s32 %s11, 1
      // Predicated region
      $region13: #{double_conv.3} parent=11 // pred_check
        %p146 = pneg %p58
      $region14: #{double_conv.3} parent=11 // pred_check_branch
        %148 = sbr.rel (%p146) target = $region16
      $region15: #{double_conv.3} parent=11 // pred_region
        _
      $region16: #{double_conv.3} parent=11 // pred_fallthru
        _
      // Predicated region
      $region17: #{double_conv.3} parent=11 // pred_check
        %p149 = pneg %p79
      $region18: #{double_conv.3} parent=11 // pred_check_branch
        %151 = sbr.rel (%p149) target = $region20
      $region19: #{double_conv.3} parent=11 // pred_region
        _
      $region20: #{double_conv.3} parent=11 // pred_fallthru
        _
    $region12: #{double_conv.3} parent=5 // pred_fallthru
      _
    %p152 = scmp.lt.s32.totalorder %s11, 2
    // Predicated region
    $region21: #{double_conv.3} parent=5 // pred_check
      %p153 = pneg %p152
    $region22: #{double_conv.3} parent=5 // pred_check_branch
      %155 = sbr.rel (%p153) target = $region24
    $region23: #{double_conv.3} parent=5 // pred_region
      // Predicated region
      $region25: #{double_conv.3} parent=23 // pred_check
        %p156 = pneg %p31
      $region26: #{double_conv.3} parent=23 // pred_check_branch
        %158 = sbr.rel (%p156) target = $region28
      $region27: #{double_conv.3} parent=23 // pred_region
        %p159 = scmp.lt.s32.totalorder %s11, 1
        %s160 = scalar_select %p159, %s11, 1
        %s161 = smul.addr %s160, 2
        %s162 = smul.addr %s161, 4
        %s163 = scalar_lea.vmem %s0, %s162
      $region28: #{double_conv.3} parent=23 // pred_fallthru
        _
    $region24: #{double_conv.3} parent=5 // pred_fallthru
      _
    %p164 = scmp.le.s32.totalorder 1, %s11
    %p165 = scmp.lt.s32.totalorder %s11, 3
    %p166 = pnand %p164, %p165
    %p167 = pneg %p166
    // Predicated region
    $region29: #{double_conv.3} parent=5 // pred_check
      _
    $region30: #{double_conv.3} parent=5 // pred_check_branch
      %169 = sbr.rel (%p166) target = $region32
    $region31: #{double_conv.3} parent=5 // pred_region
      %s170 = ssub.s32 %s11, 1
      %p171 = scmp.lt.s32.totalorder %s16, 1
      %s172 = scalar_select %p171, %s16, 1
      %s173 = smul.addr %s172, 2
      %s174 = smul.addr %s173, 4
      %s175 = scalar_lea.vmem %s0, %s174
      %p176 = pneg %p37
      %p177 = pneg %p34
      %p178 = pneg %p58
      %p179 = pneg %p55
      %p180 = pneg %p79
      %p181 = pneg %p76
      %p182 = pneg %p105
      %p183 = pneg %p102
      %p184 = scmp.lt.s32.totalorder %s16, 1
      %s185 = scalar_select %p184, %s16, 1
      %s186 = smul.addr %s185, 2
      %s187 = smul.addr %s186, 8
      %s188 = scalar_lea.vmem %s3, %s187
      %p189 = pneg %p131
      %p190 = pneg %p128
      %p191 = scmp.lt.s32.totalorder %s16, 1
      %s192 = scalar_select %p191, %s16, 1
      %s193 = smul.addr %s192, 8
      %s194 = scalar_lea.vmem %s4, %s193
      %p195 = scmp.lt.s32.totalorder %s16, 1
      %s196 = scalar_select %p195, %s16, 1
      %s197 = smul.addr %s196, 2
      %s198 = smul.addr %s197, 4
      %s199 = scalar_lea.vmem %s0, %s198
      %p200 = scmp.lt.s32.totalorder %s16, 1
      %s201 = scalar_select %p200, %s16, 1
      %s202 = smul.addr %s201, 2
      %s203 = smul.addr %s202, 8
      %s204 = scalar_lea.vmem %s3, %s203
      %p205 = scmp.lt.s32.totalorder %s16, 1
      %s206 = scalar_select %p205, %s16, 1
      %s207 = smul.addr %s206, 8
      %s208 = scalar_lea.vmem %s4, %s207
      %v209 = vld [vmem:[%s199] sm:$0xff]
      %vm210 = vcmask 134144
      %211 = vst.msk [vmem:[#allocation2] sm:$0xf] %vm210, 0.0
      %vm212 = vcmask 273544
      %213 = vst.msk [vmem:[#allocation2 + $0x8] sm:$0xf] %vm212, 0.0
      %215 = vrot.lane.b32.xlu0 %v209, 17
      %v216 = vpop.permute.xlu0 %215
      %v217 = vrot.slane %v216, 4
      %vm218 = vcmask 138240
      %v219 = vsel %vm218, %v217, %v216
      %vm222 = vcmask 1043592
      %vm223 = vcmask 1047556
      %vm224 = vmor %vm223, %vm222
      %225 = vst.msk [vmem:[#allocation2] sm:$0xff] %vm224, %v219
      %226 = vst.msk [vmem:[#allocation2 + $0x8] sm:$0xf] %vm210, %v217
      %v227 = vlaneseq
      %v228 = vand.u32 %v227, 127
      %v229 = vadd.s32 %v228, 128
      %vm230 = vcmp.lt.s32.totalorder %v228, 0
      %v231 = vsub.s32 0, %v228
      %v232 = vsel %vm230, %v231, %v228
      %v233 = vshrl.u32 %v232, 4
      %v234 = vand.u32 %v232, 15
      %v235 = vsub.s32 0, %v234
      %v236 = vsel %vm230, %v235, %v234
      %vm237 = vcmp.lt.s32.totalorder %v229, 0
      %v238 = vsub.s32 0, %v229
      %v239 = vsel %vm237, %v238, %v229
      %v240 = vshrl.u32 %v239, 4
      %v241 = vand.u32 %v239, 15
      %v242 = vsub.s32 0, %v241
      %v243 = vsel %vm237, %v242, %v241
      %vm244 = vcmp.ne.s32.totalorder %v236, 0
      %vm245 = vcmp.ne.s32.totalorder %v243, 0
      %vm246 = vcmp.lt.s32.totalorder %v236, 0
      %vm247 = vcmp.lt.s32.totalorder %v243, 0
      %vm248 = vmand %vm246, %vm244
      %vm249 = vmand %vm247, %vm245
      %v250 = vadd.s32 %v236, 16
      %v251 = vadd.s32 %v243, 16
      %v252 = vsel %vm248, %v250, %v236
      %v253 = vsel %vm249, %v251, %v243
      %vm254 = vcmp.ge.s32.totalorder %v252, 1
      %vm255 = vcmp.ge.s32.totalorder %v253, 1
      %v256 = vsel %vm254, 1, 0
      %v257 = vsel %vm255, 1, 0
      %v258 = vcvt.s32.f32 %v256
      %v259 = vcvt.s32.f32 %v257
      %vm260 = vcmp.le.s32.totalorder %v252, 14
      %vm261 = vcmp.le.s32.totalorder %v253, 14
      %v262 = vsel %vm260, 1, 0
      %v263 = vsel %vm261, 1, 0
      %v264 = vcvt.s32.f32 %v262
      %v265 = vcvt.s32.f32 %v263
      %v266 = vld [vmem:[#allocation2] sm:$0xff]
      %v269 = vcombine.low %v258, %v259
      %v271 = vmul.f32 %v266, %v269
      %v273 = vcombine.high %v271, %v271
      %275 = vst [vmem:[#allocation3] sm:$0xf] %v271
      %276 = vst [vmem:[#allocation3 + $0x8] sm:$0xf] %v273
      %v277 = vld [vmem:[#allocation2] sm:$0xff]
      %v278 = vld [vmem:[#allocation2 + $0x8] sm:$0xf]
      %v281 = vcombine.low %v277, %v277
      %v282 = vcombine.low %v278, %v278
      %283 = vrot.lane.b32.xlu0 %v281, 127
      %v284 = vpop.permute.xlu0 %283
      %285 = vrot.lane.b32.xlu0 %v277, 127
      %v286 = vpop.permute.xlu0 %285
      %287 = vrot.lane.b32.xlu0 %v282, 127
      %v288 = vpop.permute.xlu0 %287
      %vm289 = vcmask 1039360
      %v290 = vsel %vm289, %v284, %v286
      %v291 = vsel %vm289, %v286, %v288
      %294 = vst [vmem:[#allocation3] sm:$0xf0] %v290
      %295 = vst [vmem:[#allocation3 + $0x8] sm:$0xf0] %v291
      %v296 = vld [vmem:[#allocation2] sm:$0xff]
      %v297 = vld [vmem:[#allocation2 + $0x8] sm:$0xf]
      %v300 = vcombine.low %v264, %v265
      %301 = vrot.lane.b32.xlu0 %v300, 2
      %v302 = vpop.permute.xlu0 %301
      %v303 = vrot.slane %v302, 4
      %vm304 = vcmask 15360
      %v305 = vsel %vm304, %v303, %v302
      %v308 = vmul.f32 %v296, %v305
      %v309 = vmul.f32 %v297, %v303
      %v312 = vcombine.high %v308, %v308
      %313 = vrot.lane.b32.xlu0 %v308, 126
      %v314 = vpop.permute.xlu0 %313
      %315 = vrot.lane.b32.xlu0 %v312, 126
      %v316 = vpop.permute.xlu0 %315
      %317 = vrot.lane.b32.xlu0 %v309, 126
      %v318 = vpop.permute.xlu0 %317
      %vm319 = vcmask 1031168
      %v320 = vsel %vm319, %v314, %v316
      %v321 = vsel %vm319, %v316, %v318
      %324 = vst [vmem:[#allocation3 + $0x10] sm:$0xf] %v320
      %325 = vst [vmem:[#allocation3 + $0x18] sm:$0xf] %v321
      %v326 = vld [vmem:[#allocation2] sm:$0xff]
      %v327 = vld [vmem:[#allocation2 + $0x8] sm:$0xf]
      %328 = vrot.lane.b32.xlu0 %v269, 16
      %v329 = vpop.permute.xlu0 %328
      %v330 = vrot.slane %v329, 4
      %vm331 = vcmask 130048
      %v332 = vsel %vm331, %v330, %v329
      %v335 = vmul.f32 %v326, %v332
      %v336 = vmul.f32 %v327, %v330
      %v339 = vcombine.low %v335, %v335
      %v340 = vcombine.low %v336, %v336
      %341 = vrot.lane.b32.xlu0 %v339, 112
      %v342 = vpop.permute.xlu0 %341
      %343 = vrot.lane.b32.xlu0 %v335, 112
      %v344 = vpop.permute.xlu0 %343
      %345 = vrot.lane.b32.xlu0 %v340, 112
      %v346 = vpop.permute.xlu0 %345
      %vm347 = vcmask 916480
      %v348 = vsel %vm347, %v342, %v344
      %v349 = vsel %vm347, %v344, %v346
      %352 = vst [vmem:[#allocation3 + $0x10] sm:$0xf0] %v348
      %353 = vst [vmem:[#allocation3 + $0x18] sm:$0xf0] %v349
      %v354 = vld [vmem:[#allocation2] sm:$0xff]
      %v355 = vld [vmem:[#allocation2 + $0x8] sm:$0xf]
      %v358 = vcombine.high %v354, %v354
      %359 = vrot.lane.b32.xlu0 %v354, 111
      %v360 = vpop.permute.xlu0 %359
      %361 = vrot.lane.b32.xlu0 %v358, 111
      %v362 = vpop.permute.xlu0 %361
      %363 = vrot.lane.b32.xlu0 %v355, 111
      %v364 = vpop.permute.xlu0 %363
      %vm365 = vcmask 908288
      %v366 = vsel %vm365, %v360, %v362
      %v367 = vsel %vm365, %v362, %v364
      %370 = vst [vmem:[#allocation3 + $0x20] sm:$0xf] %v366
      %371 = vst [vmem:[#allocation3 + $0x28] sm:$0xf] %v367
      %v372 = vld [vmem:[#allocation2] sm:$0xff]
      %v373 = vld [vmem:[#allocation2 + $0x8] sm:$0xf]
      %374 = vrot.lane.b32.xlu0 %v300, 18
      %v375 = vpop.permute.xlu0 %374
      %v376 = vrot.slane %v375, 4
      %vm377 = vcmask 146432
      %v378 = vsel %vm377, %v376, %v375
      %v381 = vmul.f32 %v372, %v378
      %v382 = vmul.f32 %v373, %v376
      %v385 = vcombine.low %v381, %v381
      %v386 = vcombine.low %v382, %v382
      %387 = vrot.lane.b32.xlu0 %v385, 110
      %v388 = vpop.permute.xlu0 %387
      %389 = vrot.lane.b32.xlu0 %v381, 110
      %v390 = vpop.permute.xlu0 %389
      %391 = vrot.lane.b32.xlu0 %v386, 110
      %v392 = vpop.permute.xlu0 %391
      %vm393 = vcmask 900096
      %v394 = vsel %vm393, %v388, %v390
      %v395 = vsel %vm393, %v390, %v392
      %398 = vst [vmem:[#allocation3 + $0x20] sm:$0xf0] %v394
      %399 = vst [vmem:[#allocation3 + $0x28] sm:$0xf0] %v395
      %v400 = vld [vmem:[#allocation2] sm:$0xff]
      %v401 = vld [vmem:[#allocation2 + $0x8] sm:$0xf]
      %402 = vrot.lane.b32.xlu0 %v269, 32
      %v403 = vpop.permute.xlu0 %402
      %v404 = vrot.slane %v403, 4
      %vm405 = vcmask 261120
      %v406 = vsel %vm405, %v404, %v403
      %v409 = vmul.f32 %v400, %v406
      %v410 = vmul.f32 %v401, %v404
      %v413 = vcombine.high %v409, %v409
      %414 = vrot.lane.b32.xlu0 %v409, 96
      %v415 = vpop.permute.xlu0 %414
      %416 = vrot.lane.b32.xlu0 %v413, 96
      %v417 = vpop.permute.xlu0 %416
      %418 = vrot.lane.b32.xlu0 %v410, 96
      %v419 = vpop.permute.xlu0 %418
      %vm420 = vcmask 785408
      %v421 = vsel %vm420, %v415, %v417
      %v422 = vsel %vm420, %v417, %v419
      %425 = vst [vmem:[#allocation3 + $0x30] sm:$0xf] %v421
      %426 = vst [vmem:[#allocation3 + $0x38] sm:$0xf] %v422
      %v427 = vld [vmem:[#allocation2] sm:$0xff]
      %v428 = vld [vmem:[#allocation2 + $0x8] sm:$0xf]
      %v431 = vcombine.low %v427, %v427
      %v432 = vcombine.low %v428, %v428
      %433 = vrot.lane.b32.xlu0 %v431, 95
      %v434 = vpop.permute.xlu0 %433
      %435 = vrot.lane.b32.xlu0 %v427, 95
      %v436 = vpop.permute.xlu0 %435
      %437 = vrot.lane.b32.xlu0 %v432, 95
      %v438 = vpop.permute.xlu0 %437
      %vm439 = vcmask 777216
      %v440 = vsel %vm439, %v434, %v436
      %v441 = vsel %vm439, %v436, %v438
      %444 = vst [vmem:[#allocation3 + $0x30] sm:$0xf0] %v440
      %445 = vst [vmem:[#allocation3 + $0x38] sm:$0xf0] %v441
      %v446 = vld [vmem:[#allocation2] sm:$0xff]
      %v447 = vld [vmem:[#allocation2 + $0x8] sm:$0xf]
      %448 = vrot.lane.b32.xlu0 %v300, 34
      %v449 = vpop.permute.xlu0 %448
      %v450 = vrot.slane %v449, 4
      %vm451 = vcmask 277504
      %v452 = vsel %vm451, %v450, %v449
      %v455 = vmul.f32 %v446, %v452
      %v456 = vmul.f32 %v447, %v450
      %v459 = vcombine.high %v455, %v455
      %460 = vrot.lane.b32.xlu0 %v455, 94
      %v461 = vpop.permute.xlu0 %460
      %462 = vrot.lane.b32.xlu0 %v459, 94
      %v463 = vpop.permute.xlu0 %462
      %464 = vrot.lane.b32.xlu0 %v456, 94
      %v465 = vpop.permute.xlu0 %464
      %vm466 = vcmask 769024
      %v467 = vsel %vm466, %v461, %v463
      %v468 = vsel %vm466, %v463, %v465
      %471 = vst [vmem:[#allocation3 + $0x40] sm:$0xf] %v467
      %472 = vst [vmem:[#allocation3 + $0x48] sm:$0xf] %v468
      %v473 = vld [vmem:[%s1] sm:$0xff]
      %v474 = vld [vmem:[#allocation3] sm:$0xff]
      %v475 = vld [vmem:[#allocation3 + $0x8] sm:$0xff]
      %v476 = vld [vmem:[#allocation3 + $0x10] sm:$0xff]
      %v477 = vld [vmem:[#allocation3 + $0x18] sm:$0xff]
      %v478 = vld [vmem:[#allocation3 + $0x20] sm:$0xff]
      %v479 = vld [vmem:[#allocation3 + $0x28] sm:$0xff]
      %v480 = vld [vmem:[#allocation3 + $0x30] sm:$0xff]
      %v481 = vld [vmem:[#allocation3 + $0x38] sm:$0xff]
      %v482 = vld [vmem:[#allocation3 + $0x40] sm:$0xf]
      %v483 = vld [vmem:[#allocation3 + $0x48] sm:$0xf]
      %v484 = vld [vmem:[%s2] sm:$0xff]
      %486 = vset.pattern.permute.xlu0 0
      %487 = vperm.xlu0 %486, %v484
      %v488 = vpop.permute.xlu0 %487
      %vm490 = vcmask 293888
      %v492 = vsel %vm490, %v473, 0
      %vm494 = vcmask 1043456
      %v496 = vsel %vm494, %v482, 0
      %v499 = vsel %vm494, %v483, 0
      %501 = vmatprep.subr.mxu0 %v475
      %502 = vmatpush1.msra.mxu0 %v474
      %503 = vmatprep.subr.mxu0 %v477
      %504 = vmatpush1.msra.mxu0 %v476
      %505 = vmatprep.subr.mxu0 %v479
      %506 = vmatpush1.msra.mxu0 %v478
      %507 = vmatprep.subr.mxu0 %v481
      %508 = vmatpush1.msra.mxu0 %v480
      %509 = vmatprep.subr.mxu0 %v499
      %510 = vmatpush1.msra.mxu0 %v496
      %511 = vmatprep.subr.mxu0 0.0
      %512 = vmatpush1.msra.mxu0 0.0
      %513 = vmatprep.subr.mxu0 0.0
      %514 = vmatpush1.msra.mxu0 0.0
      %515 = vmatprep.subr.mxu0 0.0
      %516 = vmatpush1.msra.mxu0 0.0
      %517 = vmatprep.subr.mxu0 0.0
      %518 = vmatpush1.msra.mxu0 0.0
      %519 = vmatprep.subr.mxu0 0.0
      %520 = vmatpush1.msra.mxu0 0.0
      %521 = vmatprep.subr.mxu0 0.0
      %522 = vmatpush1.msra.mxu0 0.0
      %523 = vmatprep.subr.mxu0 0.0
      %524 = vmatpush1.msra.mxu0 0.0
      %525 = vmatprep.subr.mxu0 0.0
      %526 = vmatpush1.msra.mxu0 0.0
      %527 = vmatprep.subr.mxu0 0.0
      %528 = vmatpush1.msra.mxu0 0.0
      %529 = vmatprep.subr.mxu0 0.0
      %530 = vmatpush1.msra.mxu0 0.0
      %531 = vmatprep.subr.mxu0 0.0
      %532 = vmatpush1.msra.mxu0 0.0
      %533 = vmatprep.subr.mxu0 0.0
      %534 = vmatpush1.msra.mxu0 0.0
      %535 = vmatprep.subr.mxu0 0.0
      %536 = vmatpush1.msra.mxu0 0.0
      %537 = vmatprep.subr.mxu0 0.0
      %538 = vmatpush1.msra.mxu0 0.0
      %539 = vmatprep.subr.mxu0 0.0
      %540 = vmatpush1.msra.mxu0 0.0
      %541 = vmatprep.subr.mxu0 0.0
      %542 = vmatpush1.msra.mxu0 0.0
      %543 = vmatprep.subr.mxu0 0.0
      %544 = vmatpush1.msra.mxu0 0.0
      %545 = vmatprep.subr.mxu0 0.0
      %546 = vmatpush1.msra.mxu0 0.0
      %547 = vmatprep.subr.mxu0 0.0
      %548 = vmatpush1.msra.mxu0 0.0
      %549 = vmatprep.subr.mxu0 0.0
      %550 = vmatpush1.msra.mxu0 0.0
      %551 = vmatprep.subr.mxu0 0.0
      %552 = vmatpush1.msra.mxu0 0.0
      %553 = vmatprep.subr.mxu0 0.0
      %554 = vmatpush1.msra.mxu0 0.0
      %555 = vmatprep.subr.mxu0 0.0
      %556 = vmatpush1.msra.mxu0 0.0
      %557 = vmatprep.subr.mxu0 0.0
      %558 = vmatpush1.msra.mxu0 0.0
      %559 = vmatprep.subr.mxu0 0.0
      %560 = vmatpush1.msra.mxu0 0.0
      %561 = vmatprep.subr.mxu0 0.0
      %562 = vmatpush1.msra.mxu0 0.0
      %563 = vmatprep.subr.mxu0 0.0
      %564 = vmatpush1.msra.mxu0 0.0
      %565 = vmatprep.mubr.f32.mxu0 0.0
      %566 = vmatmul.mubr.f32.gmra.mrb[0].mxu0 %v492
      %v567 = vpop.f32.mrb[0].mxu0
      %v568 = vadd.f32 %v488, %v567
      %v569 = vpop.f32.mrb[0].mxu0
      %v570 = vadd.f32 %v488, %v569
      %571 = vdwg.mxu0
      %572 = vst [vmem:[%s204] sm:$0xff] %v568
      %573 = vst [vmem:[%s204 + $0x8] sm:$0xff] %v570
      %v574 = vadd.f32 %v568, %v570
      %575 = vadd.xlane.f32.xlu0 %v574
      %v576 = vpop.xlane.xlu0 %575
      %vm577 = vcmask 7168
      %578 = vst.msk [vmem:[%s208] sm:$0xff] %vm577, %v576
      %v579 = vmul.f32 %v568, %v568
      %v580 = vmul.f32 %v570, %v570
      %v581 = vadd.f32 %v579, %v580
      %582 = vadd.xlane.f32.xlu0 %v581
      %v583 = vpop.xlane.xlu0 %582
      %vm584 = vcmask 15368
      %585 = vst.msk [vmem:[%s208] sm:$0xff] %vm584, %v583
      %p586 = scmp.lt.s32.totalorder %s16, 1
      %s587 = scalar_select %p586, %s16, 1
      %s588 = smul.addr %s587, 2
      %s589 = smul.addr %s588, 8
      %s590 = scalar_lea.vmem %s3, %s589
      %p591 = scmp.lt.s32.totalorder %s16, 1
      %s592 = scalar_select %p591, %s16, 1
      %s593 = smul.addr %s592, 8
      %s594 = scalar_lea.vmem %s4, %s593
      // Predicated region
      $region33: #{double_conv.3} parent=31 // pred_check
        %p595 = pneg %p102
      $region34: #{double_conv.3} parent=31 // pred_check_branch
        %597 = sbr.rel (%p595) target = $region36
      $region35: #{double_conv.3} parent=31 // pred_region
        _
      $region36: #{double_conv.3} parent=31 // pred_fallthru
        _
      // Predicated region
      $region37: #{double_conv.3} parent=31 // pred_check
        %p598 = pneg %p128
      $region38: #{double_conv.3} parent=31 // pred_check_branch
        %600 = sbr.rel (%p598) target = $region40
      $region39: #{double_conv.3} parent=31 // pred_region
        _
      $region40: #{double_conv.3} parent=31 // pred_fallthru
        _
    $region32: #{double_conv.3} parent=5 // pred_fallthru
      _
    %p601 = scmp.le.s32.totalorder 2, %s11
    // Predicated region
    $region41: #{double_conv.3} parent=5 // pred_check
      %p602 = pneg %p601
    $region42: #{double_conv.3} parent=5 // pred_check_branch
      %604 = sbr.rel (%p602) target = $region44
    $region43: #{double_conv.3} parent=5 // pred_region
      %s605 = ssub.s32 %s11, 2
      // Predicated region
      $region45: #{double_conv.3} parent=43 // pred_check
        %p606 = pneg %p108
      $region46: #{double_conv.3} parent=43 // pred_check_branch
        %608 = sbr.rel (%p606) target = $region48
      $region47: #{double_conv.3} parent=43 // pred_region
        %p609 = scmp.lt.s32.totalorder %s17, 1
        %s610 = scalar_select %p609, %s17, 1
        %s611 = smul.addr %s610, 2
        %s612 = smul.addr %s611, 8
        %s613 = scalar_lea.vmem %s3, %s612
      $region48: #{double_conv.3} parent=43 // pred_fallthru
        _
      // Predicated region
      $region49: #{double_conv.3} parent=43 // pred_check
        %p614 = pneg %p134
      $region50: #{double_conv.3} parent=43 // pred_check_branch
        %616 = sbr.rel (%p614) target = $region52
      $region51: #{double_conv.3} parent=43 // pred_region
        %p617 = scmp.lt.s32.totalorder %s17, 1
        %s618 = scalar_select %p617, %s17, 1
        %s619 = smul.addr %s618, 8
        %s620 = scalar_lea.vmem %s4, %s619
      $region52: #{double_conv.3} parent=43 // pred_fallthru
        _
    $region44: #{double_conv.3} parent=5 // pred_fallthru
      _
  $region6: #{double_conv.3} parent=0 // loop_footer
    %s15 = sadd.s32 1, %s11
  $region7: #{double_conv.3} parent=0 // loop_footer_branch
    %10 = sbr.rel target = $region3
  $region8: #{double_conv.3} parent=0 // loop_exit
    _

</llo_original>
